<compile_context>
chip_gen: v7x
topology: tpu7x:2x2x1
jax: 0.10.0
libtpu: 0.0.40
codegen_flags: <defaults>
</compile_context>

<pallas_src>
import numpy as np
import jax
import jax.numpy as jnp
from jax.experimental import pallas as pl
from jax.experimental.pallas import tpu as pltpu

BOTTLENECK = 3
DIMS = [28 * 28, 128, 64, 12, BOTTLENECK, 12, 64, 128, 28 * 28]  # 8 Linear layers
LANE = 128


def _round_up(x, m):
    return ((x + m - 1) // m) * m


PADDED_DIMS = [_round_up(d, LANE) for d in DIMS]   # [896,128,...,128,896]


def ae_kernel(x_ref,
              w1, b1, w2, b2, w3, b3, w4, b4,
              w5, b5, w6, b6, w7, b7, w8, b8,
              out_ref):
    """Forward pass of the autoencoder for one (TILE_B, 896) batch tile.

    bf16 matmul operands (MXU native), f32 accumulation / bias / ReLU / tanh.
    """

    def lin(h, w_ref, b_ref):
        return jnp.dot(h, w_ref[...], preferred_element_type=jnp.float32) + b_ref[...]

    def relu_bf16(y):
        return jnp.maximum(y, 0.0).astype(jnp.bfloat16)

    h = x_ref[...]                                   # bf16 (TILE_B, 896)
    # encoder
    h = relu_bf16(lin(h, w1, b1))
    h = relu_bf16(lin(h, w2, b2))
    h = relu_bf16(lin(h, w3, b3))
    h = lin(h, w4, b4).astype(jnp.bfloat16)          # bottleneck (no activation)
    # decoder
    h = relu_bf16(lin(h, w5, b5))
    h = relu_bf16(lin(h, w6, b6))
    h = relu_bf16(lin(h, w7, b7))
    out_ref[...] = jnp.tanh(lin(h, w8, b8))          # f32 output


def init_params(key):
    """Deterministic init mirroring PyTorch nn.Linear default U(-1/sqrt(fan_in), +)."""
    params = []
    for i in range(len(DIMS) - 1):
        in_d, out_d = DIMS[i], DIMS[i + 1]
        key, k_w, k_b = jax.random.split(key, 3)
        bound = 1.0 / np.sqrt(in_d)
        w = jax.random.uniform(k_w, (in_d, out_d), jnp.float32, -bound, bound)
        b = jax.random.uniform(k_b, (out_d,), jnp.float32, -bound, bound)
        params.append((w, b))
    return params


def pad_params(params):
    """One-time (off the hot path) zero-pad of every feature dim to a multiple
    of 128 and cast of the weights to bf16.  Biases stay f32."""
    padded = []
    for (w, b) in params:
        in_d, out_d = w.shape
        in_p, out_p = _round_up(in_d, LANE), _round_up(out_d, LANE)
        w_p = jnp.zeros((in_p, out_p), jnp.bfloat16).at[:in_d, :out_d].set(
            w.astype(jnp.bfloat16))
        b_p = jnp.zeros((1, out_p), jnp.float32).at[0, :out_d].set(b)
        padded.append((w_p, b_p))
    return tuple(padded)


@jax.jit
def autoencoder_forward(x, padded_params):
    """x: (B, 784) float.  padded_params: output of pad_params (bf16 weights)."""
    B, D = x.shape
    assert D == DIMS[0]
    D_in, D_out = PADDED_DIMS[0], PADDED_DIMS[-1]

    # 256 rows matches the v6e/v7x 256x256 MXU (and is a multiple of v5e's 128);
    # tiny batches collapse to a single round_up(B, 8) tile.
    TILE_B = min(256, _round_up(B, 8))
    B_pad = _round_up(B, TILE_B)
    num_tiles = B_pad // TILE_B

    x_p = jnp.pad(x.astype(jnp.bfloat16), ((0, B_pad - B), (0, D_in - D)))

    flat_args = [x_p]
    in_specs = [pl.BlockSpec((TILE_B, D_in), lambda i: (i, 0))]
    for (w_p, b_p) in padded_params:
        flat_args += [w_p, b_p]
        # Constant index maps -> weights/biases stay VMEM-resident across the grid.
        in_specs += [
            pl.BlockSpec(w_p.shape, lambda i: (0, 0)),
            pl.BlockSpec(b_p.shape, lambda i: (0, 0)),
        ]

    out_p = pl.pallas_call(
        ae_kernel,
        out_shape=jax.ShapeDtypeStruct((B_pad, D_out), jnp.float32),
        grid=(num_tiles,),
        in_specs=in_specs,
        out_specs=pl.BlockSpec((TILE_B, D_out), lambda i: (i, 0)),
        compiler_params=pltpu.CompilerParams(
            dimension_semantics=("parallel",),        # shards batch across v7x's 2 TCs
            vmem_limit_bytes=32 * 1024 * 1024,        # ~3 MB/step footprint; safe on v7x
        ),
    )(*flat_args)

    return out_p[:B, :D]


def reference_forward(x, params):
    """Pure-JAX reference with the same bf16-operand / f32-accumulate policy."""
    h = x.astype(jnp.bfloat16)
    n = len(params)
    for i, (w, b) in enumerate(params):
        y = jnp.dot(h, w.astype(jnp.bfloat16),
                    preferred_element_type=jnp.float32) + b
        if i == n - 1:
            return jnp.tanh(y)
        if i != 3:                       # ReLU everywhere except after bottleneck layer
            y = jnp.maximum(y, 0.0)
        h = y.astype(jnp.bfloat16)


if __name__ == "__main__":
    key = jax.random.PRNGKey(0)
    k_params, k_x = jax.random.split(key)

    params = init_params(k_params)
    padded_params = pad_params(params)   # one-time padding/bf16 cast, off the hot path

    batch = 2
    x = jax.random.normal(k_x, (batch, 28 * 28), jnp.float32)

    out = autoencoder_forward(x, padded_params)
    out = jax.block_until_ready(out)

    ref = reference_forward(x, params)
    np.testing.assert_allclose(np.asarray(out), np.asarray(ref),
                               rtol=1e-2, atol=1e-2)

    assert out.shape == (batch, 28 * 28)
    print("KERNEL_OK")
</pallas_src>

<mosaic_0001>
module attributes {stable_mosaic.version = 11 : i64} {
  func.func @ae_kernel(%arg0: i32, %arg1: memref<8x896xbf16, #tpu.memory_space<vmem>>, %arg2: memref<896x128xbf16, #tpu.memory_space<vmem>>, %arg3: memref<1x128xf32, #tpu.memory_space<vmem>>, %arg4: memref<128x128xbf16, #tpu.memory_space<vmem>>, %arg5: memref<1x128xf32, #tpu.memory_space<vmem>>, %arg6: memref<128x128xbf16, #tpu.memory_space<vmem>>, %arg7: memref<1x128xf32, #tpu.memory_space<vmem>>, %arg8: memref<128x128xbf16, #tpu.memory_space<vmem>>, %arg9: memref<1x128xf32, #tpu.memory_space<vmem>>, %arg10: memref<128x128xbf16, #tpu.memory_space<vmem>>, %arg11: memref<1x128xf32, #tpu.memory_space<vmem>>, %arg12: memref<128x128xbf16, #tpu.memory_space<vmem>>, %arg13: memref<1x128xf32, #tpu.memory_space<vmem>>, %arg14: memref<128x128xbf16, #tpu.memory_space<vmem>>, %arg15: memref<1x128xf32, #tpu.memory_space<vmem>>, %arg16: memref<128x896xbf16, #tpu.memory_space<vmem>>, %arg17: memref<1x896xf32, #tpu.memory_space<vmem>>, %arg18: memref<8x896xf32, #tpu.memory_space<vmem>>) attributes {dimension_semantics = [#tpu.dimension_semantics<parallel>], iteration_bounds = array<i64: 1>, scalar_prefetch = 0 : i64, scratch_operands = 0 : i64, tpu.core_type = #tpu.core_type<tc>, window_params = [{transform_indices = @transform_0, window_bounds = array<i64: 8, 896>}, {pipeline_mode = #tpu.pipeline_mode<synchronous>, transform_indices = @transform_1, window_bounds = array<i64: 896, 128>}, {pipeline_mode = #tpu.pipeline_mode<synchronous>, transform_indices = @transform_2, window_bounds = array<i64: 1, 128>}, {pipeline_mode = #tpu.pipeline_mode<synchronous>, transform_indices = @transform_3, window_bounds = array<i64: 128, 128>}, {pipeline_mode = #tpu.pipeline_mode<synchronous>, transform_indices = @transform_4, window_bounds = array<i64: 1, 128>}, {pipeline_mode = #tpu.pipeline_mode<synchronous>, transform_indices = @transform_5, window_bounds = array<i64: 128, 128>}, {pipeline_mode = #tpu.pipeline_mode<synchronous>, transform_indices = @transform_6, window_bounds = array<i64: 1, 128>}, {pipeline_mode = #tpu.pipeline_mode<synchronous>, transform_indices = @transform_7, window_bounds = array<i64: 128, 128>}, {pipeline_mode = #tpu.pipeline_mode<synchronous>, transform_indices = @transform_8, window_bounds = array<i64: 1, 128>}, {pipeline_mode = #tpu.pipeline_mode<synchronous>, transform_indices = @transform_9, window_bounds = array<i64: 128, 128>}, {pipeline_mode = #tpu.pipeline_mode<synchronous>, transform_indices = @transform_10, window_bounds = array<i64: 1, 128>}, {pipeline_mode = #tpu.pipeline_mode<synchronous>, transform_indices = @transform_11, window_bounds = array<i64: 128, 128>}, {pipeline_mode = #tpu.pipeline_mode<synchronous>, transform_indices = @transform_12, window_bounds = array<i64: 1, 128>}, {pipeline_mode = #tpu.pipeline_mode<synchronous>, transform_indices = @transform_13, window_bounds = array<i64: 128, 128>}, {pipeline_mode = #tpu.pipeline_mode<synchronous>, transform_indices = @transform_14, window_bounds = array<i64: 1, 128>}, {pipeline_mode = #tpu.pipeline_mode<synchronous>, transform_indices = @transform_15, window_bounds = array<i64: 128, 896>}, {pipeline_mode = #tpu.pipeline_mode<synchronous>, transform_indices = @transform_16, window_bounds = array<i64: 1, 896>}, {transform_indices = @transform_17, window_bounds = array<i64: 8, 896>}]} {
    %c0 = arith.constant 0 : index
    %c0_0 = arith.constant 0 : index
    %0 = vector.load %arg1[%c0, %c0_0] : memref<8x896xbf16, #tpu.memory_space<vmem>>, vector<8x896xbf16>
    %c0_1 = arith.constant 0 : index
    %c0_2 = arith.constant 0 : index
    %1 = vector.load %arg2[%c0_1, %c0_2] : memref<896x128xbf16, #tpu.memory_space<vmem>>, vector<896x128xbf16>
    %cst = arith.constant dense<0.000000e+00> : vector<8x128xf32>
    %2 = tpu.matmul %0, %1, %cst {dimension_numbers = #tpu.dot_dimension_numbers<[1], [0], [0], [1], [0, 0, 1, 1], [], []>} : vector<8x896xbf16>, vector<896x128xbf16>, vector<8x128xf32> -> vector<8x128xf32>
    %c0_3 = arith.constant 0 : index
    %c0_4 = arith.constant 0 : index
    %3 = vector.load %arg3[%c0_3, %c0_4] : memref<1x128xf32, #tpu.memory_space<vmem>>, vector<1x128xf32>
    %4 = vector.broadcast %3 : vector<1x128xf32> to vector<8x128xf32>
    %5 = arith.addf %2, %4 : vector<8x128xf32>
    %cst_5 = arith.constant 0.000000e+00 : f32
    %6 = vector.broadcast %cst_5 : f32 to vector<8x128xf32>
    %7 = arith.maximumf %5, %6 : vector<8x128xf32>
    %8 = arith.truncf %7 : vector<8x128xf32> to vector<8x128xbf16>
    %c0_6 = arith.constant 0 : index
    %c0_7 = arith.constant 0 : index
    %9 = vector.load %arg4[%c0_6, %c0_7] : memref<128x128xbf16, #tpu.memory_space<vmem>>, vector<128x128xbf16>
    %cst_8 = arith.constant dense<0.000000e+00> : vector<8x128xf32>
    %10 = tpu.matmul %8, %9, %cst_8 {dimension_numbers = #tpu.dot_dimension_numbers<[1], [0], [0], [1], [0, 0, 1, 1], [], []>} : vector<8x128xbf16>, vector<128x128xbf16>, vector<8x128xf32> -> vector<8x128xf32>
    %c0_9 = arith.constant 0 : index
    %c0_10 = arith.constant 0 : index
    %11 = vector.load %arg5[%c0_9, %c0_10] : memref<1x128xf32, #tpu.memory_space<vmem>>, vector<1x128xf32>
    %12 = vector.broadcast %11 : vector<1x128xf32> to vector<8x128xf32>
    %13 = arith.addf %10, %12 : vector<8x128xf32>
    %cst_11 = arith.constant 0.000000e+00 : f32
    %14 = vector.broadcast %cst_11 : f32 to vector<8x128xf32>
    %15 = arith.maximumf %13, %14 : vector<8x128xf32>
    %16 = arith.truncf %15 : vector<8x128xf32> to vector<8x128xbf16>
    %c0_12 = arith.constant 0 : index
    %c0_13 = arith.constant 0 : index
    %17 = vector.load %arg6[%c0_12, %c0_13] : memref<128x128xbf16, #tpu.memory_space<vmem>>, vector<128x128xbf16>
    %cst_14 = arith.constant dense<0.000000e+00> : vector<8x128xf32>
    %18 = tpu.matmul %16, %17, %cst_14 {dimension_numbers = #tpu.dot_dimension_numbers<[1], [0], [0], [1], [0, 0, 1, 1], [], []>} : vector<8x128xbf16>, vector<128x128xbf16>, vector<8x128xf32> -> vector<8x128xf32>
    %c0_15 = arith.constant 0 : index
    %c0_16 = arith.constant 0 : index
    %19 = vector.load %arg7[%c0_15, %c0_16] : memref<1x128xf32, #tpu.memory_space<vmem>>, vector<1x128xf32>
    %20 = vector.broadcast %19 : vector<1x128xf32> to vector<8x128xf32>
    %21 = arith.addf %18, %20 : vector<8x128xf32>
    %cst_17 = arith.constant 0.000000e+00 : f32
    %22 = vector.broadcast %cst_17 : f32 to vector<8x128xf32>
    %23 = arith.maximumf %21, %22 : vector<8x128xf32>
    %24 = arith.truncf %23 : vector<8x128xf32> to vector<8x128xbf16>
    %c0_18 = arith.constant 0 : index
    %c0_19 = arith.constant 0 : index
    %25 = vector.load %arg8[%c0_18, %c0_19] : memref<128x128xbf16, #tpu.memory_space<vmem>>, vector<128x128xbf16>
    %cst_20 = arith.constant dense<0.000000e+00> : vector<8x128xf32>
    %26 = tpu.matmul %24, %25, %cst_20 {dimension_numbers = #tpu.dot_dimension_numbers<[1], [0], [0], [1], [0, 0, 1, 1], [], []>} : vector<8x128xbf16>, vector<128x128xbf16>, vector<8x128xf32> -> vector<8x128xf32>
    %c0_21 = arith.constant 0 : index
    %c0_22 = arith.constant 0 : index
    %27 = vector.load %arg9[%c0_21, %c0_22] : memref<1x128xf32, #tpu.memory_space<vmem>>, vector<1x128xf32>
    %28 = vector.broadcast %27 : vector<1x128xf32> to vector<8x128xf32>
    %29 = arith.addf %26, %28 : vector<8x128xf32>
    %30 = arith.truncf %29 : vector<8x128xf32> to vector<8x128xbf16>
    %c0_23 = arith.constant 0 : index
    %c0_24 = arith.constant 0 : index
    %31 = vector.load %arg10[%c0_23, %c0_24] : memref<128x128xbf16, #tpu.memory_space<vmem>>, vector<128x128xbf16>
    %cst_25 = arith.constant dense<0.000000e+00> : vector<8x128xf32>
    %32 = tpu.matmul %30, %31, %cst_25 {dimension_numbers = #tpu.dot_dimension_numbers<[1], [0], [0], [1], [0, 0, 1, 1], [], []>} : vector<8x128xbf16>, vector<128x128xbf16>, vector<8x128xf32> -> vector<8x128xf32>
    %c0_26 = arith.constant 0 : index
    %c0_27 = arith.constant 0 : index
    %33 = vector.load %arg11[%c0_26, %c0_27] : memref<1x128xf32, #tpu.memory_space<vmem>>, vector<1x128xf32>
    %34 = vector.broadcast %33 : vector<1x128xf32> to vector<8x128xf32>
    %35 = arith.addf %32, %34 : vector<8x128xf32>
    %cst_28 = arith.constant 0.000000e+00 : f32
    %36 = vector.broadcast %cst_28 : f32 to vector<8x128xf32>
    %37 = arith.maximumf %35, %36 : vector<8x128xf32>
    %38 = arith.truncf %37 : vector<8x128xf32> to vector<8x128xbf16>
    %c0_29 = arith.constant 0 : index
    %c0_30 = arith.constant 0 : index
    %39 = vector.load %arg12[%c0_29, %c0_30] : memref<128x128xbf16, #tpu.memory_space<vmem>>, vector<128x128xbf16>
    %cst_31 = arith.constant dense<0.000000e+00> : vector<8x128xf32>
    %40 = tpu.matmul %38, %39, %cst_31 {dimension_numbers = #tpu.dot_dimension_numbers<[1], [0], [0], [1], [0, 0, 1, 1], [], []>} : vector<8x128xbf16>, vector<128x128xbf16>, vector<8x128xf32> -> vector<8x128xf32>
    %c0_32 = arith.constant 0 : index
    %c0_33 = arith.constant 0 : index
    %41 = vector.load %arg13[%c0_32, %c0_33] : memref<1x128xf32, #tpu.memory_space<vmem>>, vector<1x128xf32>
    %42 = vector.broadcast %41 : vector<1x128xf32> to vector<8x128xf32>
    %43 = arith.addf %40, %42 : vector<8x128xf32>
    %cst_34 = arith.constant 0.000000e+00 : f32
    %44 = vector.broadcast %cst_34 : f32 to vector<8x128xf32>
    %45 = arith.maximumf %43, %44 : vector<8x128xf32>
    %46 = arith.truncf %45 : vector<8x128xf32> to vector<8x128xbf16>
    %c0_35 = arith.constant 0 : index
    %c0_36 = arith.constant 0 : index
    %47 = vector.load %arg14[%c0_35, %c0_36] : memref<128x128xbf16, #tpu.memory_space<vmem>>, vector<128x128xbf16>
    %cst_37 = arith.constant dense<0.000000e+00> : vector<8x128xf32>
    %48 = tpu.matmul %46, %47, %cst_37 {dimension_numbers = #tpu.dot_dimension_numbers<[1], [0], [0], [1], [0, 0, 1, 1], [], []>} : vector<8x128xbf16>, vector<128x128xbf16>, vector<8x128xf32> -> vector<8x128xf32>
    %c0_38 = arith.constant 0 : index
    %c0_39 = arith.constant 0 : index
    %49 = vector.load %arg15[%c0_38, %c0_39] : memref<1x128xf32, #tpu.memory_space<vmem>>, vector<1x128xf32>
    %50 = vector.broadcast %49 : vector<1x128xf32> to vector<8x128xf32>
    %51 = arith.addf %48, %50 : vector<8x128xf32>
    %cst_40 = arith.constant 0.000000e+00 : f32
    %52 = vector.broadcast %cst_40 : f32 to vector<8x128xf32>
    %53 = arith.maximumf %51, %52 : vector<8x128xf32>
    %54 = arith.truncf %53 : vector<8x128xf32> to vector<8x128xbf16>
    %c0_41 = arith.constant 0 : index
    %c0_42 = arith.constant 0 : index
    %55 = vector.load %arg16[%c0_41, %c0_42] : memref<128x896xbf16, #tpu.memory_space<vmem>>, vector<128x896xbf16>
    %cst_43 = arith.constant dense<0.000000e+00> : vector<8x896xf32>
    %56 = tpu.matmul %54, %55, %cst_43 {dimension_numbers = #tpu.dot_dimension_numbers<[1], [0], [0], [1], [0, 0, 1, 1], [], []>} : vector<8x128xbf16>, vector<128x896xbf16>, vector<8x896xf32> -> vector<8x896xf32>
    %c0_44 = arith.constant 0 : index
    %c0_45 = arith.constant 0 : index
    %57 = vector.load %arg17[%c0_44, %c0_45] : memref<1x896xf32, #tpu.memory_space<vmem>>, vector<1x896xf32>
    %58 = vector.broadcast %57 : vector<1x896xf32> to vector<8x896xf32>
    %59 = arith.addf %56, %58 : vector<8x896xf32>
    %60 = math.tanh %59 : vector<8x896xf32>
    %c0_46 = arith.constant 0 : index
    %c0_47 = arith.constant 0 : index
    %61 = vector.load %arg18[%c0_46, %c0_47] : memref<8x896xf32, #tpu.memory_space<vmem>>, vector<8x896xf32>
    tpu.vector_store %arg18[%c0_46, %c0_47], %60 {strides = array<i32>} : memref<8x896xf32, #tpu.memory_space<vmem>>, vector<8x896xf32>,
    return
  }
  func.func @transform_0(%arg0: i32) -> (i32, i32) {
    %c0_i32 = arith.constant 0 : i32
    %c0_i32_0 = arith.constant 0 : i32
    return %arg0, %c0_i32 : i32, i32
  }
  func.func @transform_1(%arg0: i32) -> (i32, i32) {
    %c0_i32 = arith.constant 0 : i32
    %c0_i32_0 = arith.constant 0 : i32
    %c0_i32_1 = arith.constant 0 : i32
    return %c0_i32, %c0_i32_0 : i32, i32
  }
  func.func @transform_2(%arg0: i32) -> (i32, i32) {
    %c0_i32 = arith.constant 0 : i32
    %c0_i32_0 = arith.constant 0 : i32
    %c0_i32_1 = arith.constant 0 : i32
    return %c0_i32, %c0_i32_0 : i32, i32
  }
  func.func @transform_3(%arg0: i32) -> (i32, i32) {
    %c0_i32 = arith.constant 0 : i32
    %c0_i32_0 = arith.constant 0 : i32
    %c0_i32_1 = arith.constant 0 : i32
    return %c0_i32, %c0_i32_0 : i32, i32
  }
  func.func @transform_4(%arg0: i32) -> (i32, i32) {
    %c0_i32 = arith.constant 0 : i32
    %c0_i32_0 = arith.constant 0 : i32
    %c0_i32_1 = arith.constant 0 : i32
    return %c0_i32, %c0_i32_0 : i32, i32
  }
  func.func @transform_5(%arg0: i32) -> (i32, i32) {
    %c0_i32 = arith.constant 0 : i32
    %c0_i32_0 = arith.constant 0 : i32
    %c0_i32_1 = arith.constant 0 : i32
    return %c0_i32, %c0_i32_0 : i32, i32
  }
  func.func @transform_6(%arg0: i32) -> (i32, i32) {
    %c0_i32 = arith.constant 0 : i32
    %c0_i32_0 = arith.constant 0 : i32
    %c0_i32_1 = arith.constant 0 : i32
    return %c0_i32, %c0_i32_0 : i32, i32
  }
  func.func @transform_7(%arg0: i32) -> (i32, i32) {
    %c0_i32 = arith.constant 0 : i32
    %c0_i32_0 = arith.constant 0 : i32
    %c0_i32_1 = arith.constant 0 : i32
    return %c0_i32, %c0_i32_0 : i32, i32
  }
  func.func @transform_8(%arg0: i32) -> (i32, i32) {
    %c0_i32 = arith.constant 0 : i32
    %c0_i32_0 = arith.constant 0 : i32
    %c0_i32_1 = arith.constant 0 : i32
    return %c0_i32, %c0_i32_0 : i32, i32
  }
  func.func @transform_9(%arg0: i32) -> (i32, i32) {
    %c0_i32 = arith.constant 0 : i32
    %c0_i32_0 = arith.constant 0 : i32
    %c0_i32_1 = arith.constant 0 : i32
    return %c0_i32, %c0_i32_0 : i32, i32
  }
  func.func @transform_10(%arg0: i32) -> (i32, i32) {
    %c0_i32 = arith.constant 0 : i32
    %c0_i32_0 = arith.constant 0 : i32
    %c0_i32_1 = arith.constant 0 : i32
    return %c0_i32, %c0_i32_0 : i32, i32
  }
  func.func @transform_11(%arg0: i32) -> (i32, i32) {
    %c0_i32 = arith.constant 0 : i32
    %c0_i32_0 = arith.constant 0 : i32
    %c0_i32_1 = arith.constant 0 : i32
    return %c0_i32, %c0_i32_0 : i32, i32
  }
  func.func @transform_12(%arg0: i32) -> (i32, i32) {
    %c0_i32 = arith.constant 0 : i32
    %c0_i32_0 = arith.constant 0 : i32
    %c0_i32_1 = arith.constant 0 : i32
    return %c0_i32, %c0_i32_0 : i32, i32
  }
  func.func @transform_13(%arg0: i32) -> (i32, i32) {
    %c0_i32 = arith.constant 0 : i32
    %c0_i32_0 = arith.constant 0 : i32
    %c0_i32_1 = arith.constant 0 : i32
    return %c0_i32, %c0_i32_0 : i32, i32
  }
  func.func @transform_14(%arg0: i32) -> (i32, i32) {
    %c0_i32 = arith.constant 0 : i32
    %c0_i32_0 = arith.constant 0 : i32
    %c0_i32_1 = arith.constant 0 : i32
    return %c0_i32, %c0_i32_0 : i32, i32
  }
  func.func @transform_15(%arg0: i32) -> (i32, i32) {
    %c0_i32 = arith.constant 0 : i32
    %c0_i32_0 = arith.constant 0 : i32
    %c0_i32_1 = arith.constant 0 : i32
    return %c0_i32, %c0_i32_0 : i32, i32
  }
  func.func @transform_16(%arg0: i32) -> (i32, i32) {
    %c0_i32 = arith.constant 0 : i32
    %c0_i32_0 = arith.constant 0 : i32
    %c0_i32_1 = arith.constant 0 : i32
    return %c0_i32, %c0_i32_0 : i32, i32
  }
  func.func @transform_17(%arg0: i32) -> (i32, i32) {
    %c0_i32 = arith.constant 0 : i32
    %c0_i32_0 = arith.constant 0 : i32
    return %arg0, %c0_i32 : i32, i32
  }
}

</mosaic_0001>

<llo_original>
// kernel: autoencoder_forward.1
$region0: #{autoencoder_forward.1}
  #allocation0 [shape = 'u32[]', space=smem, size = 0x4, offset = 0x4, fixed_abs, tag = 'smem constant byte address 0x4 - core index']
  #allocation1 [shape = 'u32[144,128]{1,0:T(1,128)}', space=vmem, size = 0x12000, scoped, tag = 'internal scratch']
  %s0 = inlined_call_operand.vmem [shape: bf16[8,896], index: 0, kind: input, shape index: {}]
  %s1 = inlined_call_operand.hbm [shape: bf16[896,128], index: 1, kind: input, shape index: {}]
  %s2 = inlined_call_operand.vmem [shape: f32[1,128], index: 2, kind: input, shape index: {}]
  %s3 = inlined_call_operand.vmem [shape: bf16[128,128], index: 3, kind: input, shape index: {}]
  %s4 = inlined_call_operand.hbm [shape: f32[1,128], index: 4, kind: input, shape index: {}]
  %s5 = inlined_call_operand.hbm [shape: bf16[128,128], index: 5, kind: input, shape index: {}]
  %s6 = inlined_call_operand.vmem [shape: f32[1,128], index: 6, kind: input, shape index: {}]
  %s7 = inlined_call_operand.hbm [shape: bf16[128,128], index: 7, kind: input, shape index: {}]
  %s8 = inlined_call_operand.vmem [shape: f32[1,128], index: 8, kind: input, shape index: {}]
  %s9 = inlined_call_operand.hbm [shape: bf16[128,128], index: 9, kind: input, shape index: {}]
  %s10 = inlined_call_operand.vmem [shape: f32[1,128], index: 10, kind: input, shape index: {}]
  %s11 = inlined_call_operand.hbm [shape: bf16[128,128], index: 11, kind: input, shape index: {}]
  %s12 = inlined_call_operand.vmem [shape: f32[1,128], index: 12, kind: input, shape index: {}]
  %s13 = inlined_call_operand.hbm [shape: bf16[128,128], index: 13, kind: input, shape index: {}]
  %s14 = inlined_call_operand.vmem [shape: f32[1,128], index: 14, kind: input, shape index: {}]
  %s15 = inlined_call_operand.hbm [shape: bf16[128,896], index: 15, kind: input, shape index: {}]
  %s16 = inlined_call_operand.vmem [shape: f32[1,896], index: 16, kind: input, shape index: {}]
  %s17 = inlined_call_operand.vmem [shape: f32[8,896], index: 17, kind: output, shape index: {}]
  %s18 = sld [smem:[#allocation0]]
  $region110: #{autoencoder_forward.1} parent=0
    _
  %s20 = ssub.s32 1, %s18
  %s21 = scalar_select 0, %s20, %s18
  $region1: #{autoencoder_forward.1} parent=0
    #allocation2 [shape = 'u8[229376]{0}', space=vmem, size = 0x38000, scoped, tag = 'input window, operand 1, single buffered']
    #allocation3 [shape = 's32[1]{0}', space=sflag, size = 0x4, scoped, tag = 'scoped memory for autoencoder_forward.1']
    #allocation4 [shape = 'u8[512]{0}', space=vmem, size = 0x400, scoped, tag = 'input window, operand 4, single buffered']
    #allocation5 [shape = 's32[1]{0}', space=sflag, size = 0x4, scoped, tag = 'scoped memory for autoencoder_forward.1']
    #allocation6 [shape = 'u8[32768]{0}', space=vmem, size = 0x8000, scoped, tag = 'input window, operand 5, single buffered']
    #allocation7 [shape = 'u8[32768]{0}', space=vmem, size = 0x8000, scoped, tag = 'input window, operand 7, single buffered']
    #allocation8 [shape = 's32[1]{0}', space=sflag, size = 0x4, scoped, tag = 'scoped memory for autoencoder_forward.1']
    #allocation9 [shape = 'u8[32768]{0}', space=vmem, size = 0x8000, scoped, tag = 'input window, operand 9, single buffered']
    #allocation10 [shape = 'u8[32768]{0}', space=vmem, size = 0x8000, scoped, tag = 'input window, operand 11, single buffered']
    #allocation11 [shape = 's32[1]{0}', space=sflag, size = 0x4, scoped, tag = 'scoped memory for autoencoder_forward.1']
    #allocation12 [shape = 'u8[32768]{0}', space=vmem, size = 0x8000, scoped, tag = 'input window, operand 13, single buffered']
    #allocation13 [shape = 'u8[229376]{0}', space=vmem, size = 0x38000, scoped, tag = 'input window, operand 15, single buffered']
    #allocation14 [shape = 's32[1]{0}', space=sflag, size = 0x4, scoped, tag = 'scoped memory for autoencoder_forward.1']
    %22 = vsyncpa [#allocation3], 0
    %23 = vsyncpa [#allocation5], 0
    %24 = vsyncpa [#allocation8], 0
    %25 = vsyncpa [#allocation11], 0
    %26 = vsyncpa [#allocation14], 0
    // Predicated region
    $region2: #{autoencoder_forward.1} parent=1 // pred_check
      _
    $region3: #{autoencoder_forward.1} parent=1 // pred_check_branch
      %28 = sbr.rel (0) target = $region5
    $region4: #{autoencoder_forward.1} parent=1 // pred_region
      _
    $region5: #{autoencoder_forward.1} parent=1 // pred_fallthru
      _
    // Predicated region
    $region6: #{autoencoder_forward.1} parent=1 // pred_check
      _
    $region7: #{autoencoder_forward.1} parent=1 // pred_check_branch
      %30 = sbr.rel (0) target = $region9
    $region8: #{autoencoder_forward.1} parent=1 // pred_region
      %s32 = ssub.s32 7168, 7168
      %33 = vsyncadd [#allocation3], %s32
      %s34 = sshll.u32 [#allocation2], 4
      %s35 = int_to_ptr.vmem [resolvable:$true] %s34
      %40 = dma.hbm_to_vmem [thread:$0]  %s1, 7168, %s35, [#allocation3], 64, 64, 4
    $region9: #{autoencoder_forward.1} parent=1 // pred_fallthru
      _
    // Predicated region
    $region10: #{autoencoder_forward.1} parent=1 // pred_check
      _
    $region11: #{autoencoder_forward.1} parent=1 // pred_check_branch
      %42 = sbr.rel (0) target = $region13
    $region12: #{autoencoder_forward.1} parent=1 // pred_region
      _
    $region13: #{autoencoder_forward.1} parent=1 // pred_fallthru
      _
    // Predicated region
    $region14: #{autoencoder_forward.1} parent=1 // pred_check
      _
    $region15: #{autoencoder_forward.1} parent=1 // pred_check_branch
      %44 = sbr.rel (0) target = $region17
    $region16: #{autoencoder_forward.1} parent=1 // pred_region
      _
    $region17: #{autoencoder_forward.1} parent=1 // pred_fallthru
      _
    // Predicated region
    $region18: #{autoencoder_forward.1} parent=1 // pred_check
      _
    $region19: #{autoencoder_forward.1} parent=1 // pred_check_branch
      %46 = sbr.rel (0) target = $region21
    $region20: #{autoencoder_forward.1} parent=1 // pred_region
      %s48 = ssub.s32 16, 16
      %49 = vsyncadd [#allocation5], %s48
      %s51 = sshll.u32 [#allocation4], 4
      %s52 = int_to_ptr.vmem [resolvable:$true] %s51
      %54 = dma.hbm_to_vmem [thread:$0]  %s4, 16, %s52, [#allocation5]
    $region21: #{autoencoder_forward.1} parent=1 // pred_fallthru
      _
    // Predicated region
    $region22: #{autoencoder_forward.1} parent=1 // pred_check
      _
    $region23: #{autoencoder_forward.1} parent=1 // pred_check_branch
      %56 = sbr.rel (0) target = $region25
    $region24: #{autoencoder_forward.1} parent=1 // pred_region
      %s58 = ssub.s32 1024, 1024
      %59 = vsyncadd [#allocation5], %s58
      %s60 = sshll.u32 [#allocation6], 4
      %s61 = int_to_ptr.vmem [resolvable:$true] %s60
      %66 = dma.hbm_to_vmem [thread:$0]  %s5, 1024, %s61, [#allocation5], 64, 64, 4
    $region25: #{autoencoder_forward.1} parent=1 // pred_fallthru
      _
    // Predicated region
    $region26: #{autoencoder_forward.1} parent=1 // pred_check
      _
    $region27: #{autoencoder_forward.1} parent=1 // pred_check_branch
      %68 = sbr.rel (0) target = $region29
    $region28: #{autoencoder_forward.1} parent=1 // pred_region
      _
    $region29: #{autoencoder_forward.1} parent=1 // pred_fallthru
      _
    // Predicated region
    $region30: #{autoencoder_forward.1} parent=1 // pred_check
      _
    $region31: #{autoencoder_forward.1} parent=1 // pred_check_branch
      %70 = sbr.rel (0) target = $region33
    $region32: #{autoencoder_forward.1} parent=1 // pred_region
      %s72 = ssub.s32 1024, 1024
      %73 = vsyncadd [#allocation8], %s72
      %s74 = sshll.u32 [#allocation7], 4
      %s75 = int_to_ptr.vmem [resolvable:$true] %s74
      %80 = dma.hbm_to_vmem [thread:$0]  %s7, 1024, %s75, [#allocation8], 64, 64, 4
    $region33: #{autoencoder_forward.1} parent=1 // pred_fallthru
      _
    // Predicated region
    $region34: #{autoencoder_forward.1} parent=1 // pred_check
      _
    $region35: #{autoencoder_forward.1} parent=1 // pred_check_branch
      %82 = sbr.rel (0) target = $region37
    $region36: #{autoencoder_forward.1} parent=1 // pred_region
      _
    $region37: #{autoencoder_forward.1} parent=1 // pred_fallthru
      _
    // Predicated region
    $region38: #{autoencoder_forward.1} parent=1 // pred_check
      _
    $region39: #{autoencoder_forward.1} parent=1 // pred_check_branch
      %84 = sbr.rel (0) target = $region41
    $region40: #{autoencoder_forward.1} parent=1 // pred_region
      %s86 = ssub.s32 1024, 1024
      %87 = vsyncadd [#allocation8], %s86
      %s88 = sshll.u32 [#allocation9], 4
      %s89 = int_to_ptr.vmem [resolvable:$true] %s88
      %94 = dma.hbm_to_vmem [thread:$0]  %s9, 1024, %s89, [#allocation8], 64, 64, 4
    $region41: #{autoencoder_forward.1} parent=1 // pred_fallthru
      _
    // Predicated region
    $region42: #{autoencoder_forward.1} parent=1 // pred_check
      _
    $region43: #{autoencoder_forward.1} parent=1 // pred_check_branch
      %96 = sbr.rel (0) target = $region45
    $region44: #{autoencoder_forward.1} parent=1 // pred_region
      _
    $region45: #{autoencoder_forward.1} parent=1 // pred_fallthru
      _
    // Predicated region
    $region46: #{autoencoder_forward.1} parent=1 // pred_check
      _
    $region47: #{autoencoder_forward.1} parent=1 // pred_check_branch
      %98 = sbr.rel (0) target = $region49
    $region48: #{autoencoder_forward.1} parent=1 // pred_region
      %s100 = ssub.s32 1024, 1024
      %101 = vsyncadd [#allocation11], %s100
      %s102 = sshll.u32 [#allocation10], 4
      %s103 = int_to_ptr.vmem [resolvable:$true] %s102
      %108 = dma.hbm_to_vmem [thread:$0]  %s11, 1024, %s103, [#allocation11], 64, 64, 4
    $region49: #{autoencoder_forward.1} parent=1 // pred_fallthru
      _
    // Predicated region
    $region50: #{autoencoder_forward.1} parent=1 // pred_check
      _
    $region51: #{autoencoder_forward.1} parent=1 // pred_check_branch
      %110 = sbr.rel (0) target = $region53
    $region52: #{autoencoder_forward.1} parent=1 // pred_region
      _
    $region53: #{autoencoder_forward.1} parent=1 // pred_fallthru
      _
    // Predicated region
    $region54: #{autoencoder_forward.1} parent=1 // pred_check
      _
    $region55: #{autoencoder_forward.1} parent=1 // pred_check_branch
      %112 = sbr.rel (0) target = $region57
    $region56: #{autoencoder_forward.1} parent=1 // pred_region
      %s114 = ssub.s32 1024, 1024
      %115 = vsyncadd [#allocation11], %s114
      %s116 = sshll.u32 [#allocation12], 4
      %s117 = int_to_ptr.vmem [resolvable:$true] %s116
      %122 = dma.hbm_to_vmem [thread:$0]  %s13, 1024, %s117, [#allocation11], 64, 64, 4
    $region57: #{autoencoder_forward.1} parent=1 // pred_fallthru
      _
    // Predicated region
    $region58: #{autoencoder_forward.1} parent=1 // pred_check
      _
    $region59: #{autoencoder_forward.1} parent=1 // pred_check_branch
      %124 = sbr.rel (0) target = $region61
    $region60: #{autoencoder_forward.1} parent=1 // pred_region
      _
    $region61: #{autoencoder_forward.1} parent=1 // pred_fallthru
      _
    // Predicated region
    $region62: #{autoencoder_forward.1} parent=1 // pred_check
      _
    $region63: #{autoencoder_forward.1} parent=1 // pred_check_branch
      %126 = sbr.rel (0) target = $region65
    $region64: #{autoencoder_forward.1} parent=1 // pred_region
      %s128 = ssub.s32 7168, 7168
      %129 = vsyncadd [#allocation14], %s128
      %s130 = sshll.u32 [#allocation13], 4
      %s131 = int_to_ptr.vmem [resolvable:$true] %s130
      %136 = dma.hbm_to_vmem [thread:$0]  %s15, 7168, %s131, [#allocation14], 448, 448, 28
    $region65: #{autoencoder_forward.1} parent=1 // pred_fallthru
      _
    // Predicated region
    $region66: #{autoencoder_forward.1} parent=1 // pred_check
      _
    $region67: #{autoencoder_forward.1} parent=1 // pred_check_branch
      %138 = sbr.rel (0) target = $region69
    $region68: #{autoencoder_forward.1} parent=1 // pred_region
      _
    $region69: #{autoencoder_forward.1} parent=1 // pred_fallthru
      _
    // Predicated region
    $region70: #{autoencoder_forward.1} parent=1 // pred_check
      _
    $region71: #{autoencoder_forward.1} parent=1 // pred_check_branch
      %140 = sbr.rel (0) target = $region73
    $region72: #{autoencoder_forward.1} parent=1 // pred_region
      %141 = dma.done [#allocation3], 7168
    $region73: #{autoencoder_forward.1} parent=1 // pred_fallthru
      _
    // Predicated region
    $region74: #{autoencoder_forward.1} parent=1 // pred_check
      _
    $region75: #{autoencoder_forward.1} parent=1 // pred_check_branch
      %143 = sbr.rel (0) target = $region77
    $region76: #{autoencoder_forward.1} parent=1 // pred_region
      %144 = dma.done [#allocation5], 16
    $region77: #{autoencoder_forward.1} parent=1 // pred_fallthru
      _
    // Predicated region
    $region78: #{autoencoder_forward.1} parent=1 // pred_check
      _
    $region79: #{autoencoder_forward.1} parent=1 // pred_check_branch
      %146 = sbr.rel (0) target = $region81
    $region80: #{autoencoder_forward.1} parent=1 // pred_region
      %147 = dma.done [#allocation5], 1024
    $region81: #{autoencoder_forward.1} parent=1 // pred_fallthru
      _
    // Predicated region
    $region82: #{autoencoder_forward.1} parent=1 // pred_check
      _
    $region83: #{autoencoder_forward.1} parent=1 // pred_check_branch
      %149 = sbr.rel (0) target = $region85
    $region84: #{autoencoder_forward.1} parent=1 // pred_region
      %150 = dma.done [#allocation8], 1024
    $region85: #{autoencoder_forward.1} parent=1 // pred_fallthru
      _
    // Predicated region
    $region86: #{autoencoder_forward.1} parent=1 // pred_check
      _
    $region87: #{autoencoder_forward.1} parent=1 // pred_check_branch
      %152 = sbr.rel (0) target = $region89
    $region88: #{autoencoder_forward.1} parent=1 // pred_region
      %153 = dma.done [#allocation8], 1024
    $region89: #{autoencoder_forward.1} parent=1 // pred_fallthru
      _
    // Predicated region
    $region90: #{autoencoder_forward.1} parent=1 // pred_check
      _
    $region91: #{autoencoder_forward.1} parent=1 // pred_check_branch
      %155 = sbr.rel (0) target = $region93
    $region92: #{autoencoder_forward.1} parent=1 // pred_region
      %156 = dma.done [#allocation11], 1024
    $region93: #{autoencoder_forward.1} parent=1 // pred_fallthru
      _
    // Predicated region
    $region94: #{autoencoder_forward.1} parent=1 // pred_check
      _
    $region95: #{autoencoder_forward.1} parent=1 // pred_check_branch
      %158 = sbr.rel (0) target = $region97
    $region96: #{autoencoder_forward.1} parent=1 // pred_region
      %159 = dma.done [#allocation11], 1024
    $region97: #{autoencoder_forward.1} parent=1 // pred_fallthru
      _
    // Predicated region
    $region98: #{autoencoder_forward.1} parent=1 // pred_check
      _
    $region99: #{autoencoder_forward.1} parent=1 // pred_check_branch
      %161 = sbr.rel (0) target = $region101
    $region100: #{autoencoder_forward.1} parent=1 // pred_region
      %162 = dma.done [#allocation14], 7168
    $region101: #{autoencoder_forward.1} parent=1 // pred_fallthru
      _
    %v164 = vld [vmem:[%s0] sm:$0xff]
    %v165 = vld [vmem:[%s0 + $0x8] sm:$0xff]
    %v166 = vld [vmem:[%s0 + $0x10] sm:$0xff]
    %v167 = vld [vmem:[%s0 + $0x18] sm:$0xf]
    %v168 = vld [vmem:[#allocation2] sm:$0xf]
    %v169 = vld [vmem:[#allocation2 + $0x4] sm:$0xf]
    %v170 = vld [vmem:[#allocation2 + $0x8] sm:$0xf]
    %v171 = vld [vmem:[#allocation2 + $0xc] sm:$0xf]
    %v172 = vld [vmem:[#allocation2 + $0x10] sm:$0xf]
    %v173 = vld [vmem:[#allocation2 + $0x14] sm:$0xf]
    %v174 = vld [vmem:[#allocation2 + $0x18] sm:$0xf]
    %v175 = vld [vmem:[#allocation2 + $0x1c] sm:$0xf]
    %v176 = vld [vmem:[#allocation2 + $0x20] sm:$0xf]
    %v177 = vld [vmem:[#allocation2 + $0x24] sm:$0xf]
    %v178 = vld [vmem:[#allocation2 + $0x28] sm:$0xf]
    %v179 = vld [vmem:[#allocation2 + $0x2c] sm:$0xf]
    %v180 = vld [vmem:[#allocation2 + $0x30] sm:$0xf]
    %v181 = vld [vmem:[#allocation2 + $0x34] sm:$0xf]
    %v182 = vld [vmem:[#allocation2 + $0x38] sm:$0xf]
    %v183 = vld [vmem:[#allocation2 + $0x3c] sm:$0xf]
    %v184 = vld [vmem:[#allocation2 + $0x40] sm:$0xf]
    %v185 = vld [vmem:[#allocation2 + $0x44] sm:$0xf]
    %v186 = vld [vmem:[#allocation2 + $0x48] sm:$0xf]
    %v187 = vld [vmem:[#allocation2 + $0x4c] sm:$0xf]
    %v188 = vld [vmem:[#allocation2 + $0x50] sm:$0xf]
    %v189 = vld [vmem:[#allocation2 + $0x54] sm:$0xf]
    %v190 = vld [vmem:[#allocation2 + $0x58] sm:$0xf]
    %v191 = vld [vmem:[#allocation2 + $0x5c] sm:$0xf]
    %v192 = vld [vmem:[#allocation2 + $0x60] sm:$0xf]
    %v193 = vld [vmem:[#allocation2 + $0x64] sm:$0xf]
    %v194 = vld [vmem:[#allocation2 + $0x68] sm:$0xf]
    %v195 = vld [vmem:[#allocation2 + $0x6c] sm:$0xf]
    %v196 = vld [vmem:[#allocation2 + $0x70] sm:$0xf]
    %v197 = vld [vmem:[#allocation2 + $0x74] sm:$0xf]
    %v198 = vld [vmem:[#allocation2 + $0x78] sm:$0xf]
    %v199 = vld [vmem:[#allocation2 + $0x7c] sm:$0xf]
    %v200 = vld [vmem:[#allocation2 + $0x80] sm:$0xf]
    %v201 = vld [vmem:[#allocation2 + $0x84] sm:$0xf]
    %v202 = vld [vmem:[#allocation2 + $0x88] sm:$0xf]
    %v203 = vld [vmem:[#allocation2 + $0x8c] sm:$0xf]
    %v204 = vld [vmem:[#allocation2 + $0x90] sm:$0xf]
    %v205 = vld [vmem:[#allocation2 + $0x94] sm:$0xf]
    %v206 = vld [vmem:[#allocation2 + $0x98] sm:$0xf]
    %v207 = vld [vmem:[#allocation2 + $0x9c] sm:$0xf]
    %v208 = vld [vmem:[#allocation2 + $0xa0] sm:$0xf]
    %v209 = vld [vmem:[#allocation2 + $0xa4] sm:$0xf]
    %v210 = vld [vmem:[#allocation2 + $0xa8] sm:$0xf]
    %v211 = vld [vmem:[#allocation2 + $0xac] sm:$0xf]
    %v212 = vld [vmem:[#allocation2 + $0xb0] sm:$0xf]
    %v213 = vld [vmem:[#allocation2 + $0xb4] sm:$0xf]
    %v214 = vld [vmem:[#allocation2 + $0xb8] sm:$0xf]
    %v215 = vld [vmem:[#allocation2 + $0xbc] sm:$0xf]
    %v216 = vld [vmem:[#allocation2 + $0xc0] sm:$0xf]
    %v217 = vld [vmem:[#allocation2 + $0xc4] sm:$0xf]
    %v218 = vld [vmem:[#allocation2 + $0xc8] sm:$0xf]
    %v219 = vld [vmem:[#allocation2 + $0xcc] sm:$0xf]
    %v220 = vld [vmem:[#allocation2 + $0xd0] sm:$0xf]
    %v221 = vld [vmem:[#allocation2 + $0xd4] sm:$0xf]
    %v222 = vld [vmem:[#allocation2 + $0xd8] sm:$0xf]
    %v223 = vld [vmem:[#allocation2 + $0xdc] sm:$0xf]
    %v224 = vld [vmem:[#allocation2 + $0xe0] sm:$0xf]
    %v225 = vld [vmem:[#allocation2 + $0xe4] sm:$0xf]
    %v226 = vld [vmem:[#allocation2 + $0xe8] sm:$0xf]
    %v227 = vld [vmem:[#allocation2 + $0xec] sm:$0xf]
    %v228 = vld [vmem:[#allocation2 + $0xf0] sm:$0xf]
    %v229 = vld [vmem:[#allocation2 + $0xf4] sm:$0xf]
    %v230 = vld [vmem:[#allocation2 + $0xf8] sm:$0xf]
    %v231 = vld [vmem:[#allocation2 + $0xfc] sm:$0xf]
    %v232 = vld [vmem:[#allocation2 + $0x100] sm:$0xf]
    %v233 = vld [vmem:[#allocation2 + $0x104] sm:$0xf]
    %v234 = vld [vmem:[#allocation2 + $0x108] sm:$0xf]
    %v235 = vld [vmem:[#allocation2 + $0x10c] sm:$0xf]
    %v236 = vld [vmem:[#allocation2 + $0x110] sm:$0xf]
    %v237 = vld [vmem:[#allocation2 + $0x114] sm:$0xf]
    %v238 = vld [vmem:[#allocation2 + $0x118] sm:$0xf]
    %v239 = vld [vmem:[#allocation2 + $0x11c] sm:$0xf]
    %v240 = vld [vmem:[#allocation2 + $0x120] sm:$0xf]
    %v241 = vld [vmem:[#allocation2 + $0x124] sm:$0xf]
    %v242 = vld [vmem:[#allocation2 + $0x128] sm:$0xf]
    %v243 = vld [vmem:[#allocation2 + $0x12c] sm:$0xf]
    %v244 = vld [vmem:[#allocation2 + $0x130] sm:$0xf]
    %v245 = vld [vmem:[#allocation2 + $0x134] sm:$0xf]
    %v246 = vld [vmem:[#allocation2 + $0x138] sm:$0xf]
    %v247 = vld [vmem:[#allocation2 + $0x13c] sm:$0xf]
    %v248 = vld [vmem:[#allocation2 + $0x140] sm:$0xf]
    %v249 = vld [vmem:[#allocation2 + $0x144] sm:$0xf]
    %v250 = vld [vmem:[#allocation2 + $0x148] sm:$0xf]
    %v251 = vld [vmem:[#allocation2 + $0x14c] sm:$0xf]
    %v252 = vld [vmem:[#allocation2 + $0x150] sm:$0xf]
    %v253 = vld [vmem:[#allocation2 + $0x154] sm:$0xf]
    %v254 = vld [vmem:[#allocation2 + $0x158] sm:$0xf]
    %v255 = vld [vmem:[#allocation2 + $0x15c] sm:$0xf]
    %v256 = vld [vmem:[#allocation2 + $0x160] sm:$0xf]
    %v257 = vld [vmem:[#allocation2 + $0x164] sm:$0xf]
    %v258 = vld [vmem:[#allocation2 + $0x168] sm:$0xf]
    %v259 = vld [vmem:[#allocation2 + $0x16c] sm:$0xf]
    %v260 = vld [vmem:[#allocation2 + $0x170] sm:$0xf]
    %v261 = vld [vmem:[#allocation2 + $0x174] sm:$0xf]
    %v262 = vld [vmem:[#allocation2 + $0x178] sm:$0xf]
    %v263 = vld [vmem:[#allocation2 + $0x17c] sm:$0xf]
    %v264 = vld [vmem:[#allocation2 + $0x180] sm:$0xf]
    %v265 = vld [vmem:[#allocation2 + $0x184] sm:$0xf]
    %v266 = vld [vmem:[#allocation2 + $0x188] sm:$0xf]
    %v267 = vld [vmem:[#allocation2 + $0x18c] sm:$0xf]
    %v268 = vld [vmem:[#allocation2 + $0x190] sm:$0xf]
    %v269 = vld [vmem:[#allocation2 + $0x194] sm:$0xf]
    %v270 = vld [vmem:[#allocation2 + $0x198] sm:$0xf]
    %v271 = vld [vmem:[#allocation2 + $0x19c] sm:$0xf]
    %v272 = vld [vmem:[#allocation2 + $0x1a0] sm:$0xf]
    %v273 = vld [vmem:[#allocation2 + $0x1a4] sm:$0xf]
    %v274 = vld [vmem:[#allocation2 + $0x1a8] sm:$0xf]
    %v275 = vld [vmem:[#allocation2 + $0x1ac] sm:$0xf]
    %v276 = vld [vmem:[#allocation2 + $0x1b0] sm:$0xf]
    %v277 = vld [vmem:[#allocation2 + $0x1b4] sm:$0xf]
    %v278 = vld [vmem:[#allocation2 + $0x1b8] sm:$0xf]
    %v279 = vld [vmem:[#allocation2 + $0x1bc] sm:$0xf]
    %v280 = vld [vmem:[%s2] sm:$0x1]
    %v282 = vlaneseq
    %v283 = vshrl.u32 %v282, 7
    %v284 = vsub.s32 0, %v283
    %v285 = vrot.slane %v280, %v284
    %v291 = vunpack.c.l.b16 %v164
    %v292 = vunpack.c.h.b16 %v164
    %v293 = vunpack.c.l.b16 %v165
    %v294 = vunpack.c.h.b16 %v165
    %v295 = vunpack.c.l.b16 %v166
    %v296 = vunpack.c.h.b16 %v166
    %v297 = vunpack.c.l.b16 %v167
    %v298 = vpack.c.b16 %v291, %v291
    %v299 = vpack.c.b16 %v292, %v292
    %v300 = vpack.c.b16 %v293, %v293
    %v301 = vpack.c.b16 %v294, %v294
    %v302 = vpack.c.b16 %v295, %v295
    %v303 = vpack.c.b16 %v296, %v296
    %v304 = vpack.c.b16 %v297, %v297
    %v424 = vunpack.c.l.b16 %v168
    %v425 = vunpack.c.l.b16 %v169
    %v426 = vunpack.c.l.b16 %v170
    %v427 = vunpack.c.l.b16 %v171
    %v428 = vunpack.c.l.b16 %v172
    %v429 = vunpack.c.l.b16 %v173
    %v430 = vunpack.c.l.b16 %v174
    %v431 = vunpack.c.l.b16 %v175
    %v432 = vunpack.c.l.b16 %v176
    %v433 = vunpack.c.l.b16 %v177
    %v434 = vunpack.c.l.b16 %v178
    %v435 = vunpack.c.l.b16 %v179
    %v436 = vunpack.c.l.b16 %v180
    %v437 = vunpack.c.l.b16 %v181
    %v438 = vunpack.c.l.b16 %v182
    %v439 = vunpack.c.l.b16 %v183
    %v440 = vunpack.c.l.b16 %v184
    %v441 = vunpack.c.l.b16 %v185
    %v442 = vunpack.c.l.b16 %v186
    %v443 = vunpack.c.l.b16 %v187
    %v444 = vunpack.c.l.b16 %v188
    %v445 = vunpack.c.l.b16 %v189
    %v446 = vunpack.c.l.b16 %v190
    %v447 = vunpack.c.l.b16 %v191
    %v448 = vunpack.c.l.b16 %v192
    %v449 = vunpack.c.l.b16 %v193
    %v450 = vunpack.c.l.b16 %v194
    %v451 = vunpack.c.l.b16 %v195
    %v452 = vunpack.c.l.b16 %v196
    %v453 = vunpack.c.l.b16 %v197
    %v454 = vunpack.c.l.b16 %v198
    %v455 = vunpack.c.l.b16 %v199
    %v456 = vunpack.c.l.b16 %v200
    %v457 = vunpack.c.l.b16 %v201
    %v458 = vunpack.c.l.b16 %v202
    %v459 = vunpack.c.l.b16 %v203
    %v460 = vunpack.c.l.b16 %v204
    %v461 = vunpack.c.l.b16 %v205
    %v462 = vunpack.c.l.b16 %v206
    %v463 = vunpack.c.l.b16 %v207
    %v464 = vunpack.c.l.b16 %v208
    %v465 = vunpack.c.l.b16 %v209
    %v466 = vunpack.c.l.b16 %v210
    %v467 = vunpack.c.l.b16 %v211
    %v468 = vunpack.c.l.b16 %v212
    %v469 = vunpack.c.l.b16 %v213
    %v470 = vunpack.c.l.b16 %v214
    %v471 = vunpack.c.l.b16 %v215
    %v472 = vunpack.c.l.b16 %v216
    %v473 = vunpack.c.l.b16 %v217
    %v474 = vunpack.c.l.b16 %v218
    %v475 = vunpack.c.l.b16 %v219
    %v476 = vunpack.c.l.b16 %v220
    %v477 = vunpack.c.l.b16 %v221
    %v478 = vunpack.c.l.b16 %v222
    %v479 = vunpack.c.l.b16 %v223
    %v480 = vunpack.c.l.b16 %v224
    %v481 = vunpack.c.l.b16 %v225
    %v482 = vunpack.c.l.b16 %v226
    %v483 = vunpack.c.l.b16 %v227
    %v484 = vunpack.c.l.b16 %v228
    %v485 = vunpack.c.l.b16 %v229
    %v486 = vunpack.c.l.b16 %v230
    %v487 = vunpack.c.l.b16 %v231
    %v488 = vunpack.c.l.b16 %v232
    %v489 = vunpack.c.l.b16 %v233
    %v490 = vunpack.c.l.b16 %v234
    %v491 = vunpack.c.l.b16 %v235
    %v492 = vunpack.c.l.b16 %v236
    %v493 = vunpack.c.l.b16 %v237
    %v494 = vunpack.c.l.b16 %v238
    %v495 = vunpack.c.l.b16 %v239
    %v496 = vunpack.c.l.b16 %v240
    %v497 = vunpack.c.l.b16 %v241
    %v498 = vunpack.c.l.b16 %v242
    %v499 = vunpack.c.l.b16 %v243
    %v500 = vunpack.c.l.b16 %v244
    %v501 = vunpack.c.l.b16 %v245
    %v502 = vunpack.c.l.b16 %v246
    %v503 = vunpack.c.l.b16 %v247
    %v504 = vunpack.c.l.b16 %v248
    %v505 = vunpack.c.l.b16 %v249
    %v506 = vunpack.c.l.b16 %v250
    %v507 = vunpack.c.l.b16 %v251
    %v508 = vunpack.c.l.b16 %v252
    %v509 = vunpack.c.l.b16 %v253
    %v510 = vunpack.c.l.b16 %v254
    %v511 = vunpack.c.l.b16 %v255
    %v512 = vunpack.c.l.b16 %v256
    %v513 = vunpack.c.l.b16 %v257
    %v514 = vunpack.c.l.b16 %v258
    %v515 = vunpack.c.l.b16 %v259
    %v516 = vunpack.c.l.b16 %v260
    %v517 = vunpack.c.l.b16 %v261
    %v518 = vunpack.c.l.b16 %v262
    %v519 = vunpack.c.l.b16 %v263
    %v520 = vunpack.c.l.b16 %v264
    %v521 = vunpack.c.l.b16 %v265
    %v522 = vunpack.c.l.b16 %v266
    %v523 = vunpack.c.l.b16 %v267
    %v524 = vunpack.c.l.b16 %v268
    %v525 = vunpack.c.l.b16 %v269
    %v526 = vunpack.c.l.b16 %v270
    %v527 = vunpack.c.l.b16 %v271
    %v528 = vunpack.c.l.b16 %v272
    %v529 = vunpack.c.l.b16 %v273
    %v530 = vunpack.c.l.b16 %v274
    %v531 = vunpack.c.l.b16 %v275
    %v532 = vunpack.c.l.b16 %v276
    %v533 = vunpack.c.l.b16 %v277
    %v534 = vunpack.c.l.b16 %v278
    %v535 = vunpack.c.l.b16 %v279
    %v536 = vpack.c.b16 %v425, %v424
    %v537 = vpack.c.b16 %v427, %v426
    %v538 = vpack.c.b16 %v429, %v428
    %v539 = vpack.c.b16 %v431, %v430
    %v540 = vpack.c.b16 %v433, %v432
    %v541 = vpack.c.b16 %v435, %v434
    %v542 = vpack.c.b16 %v437, %v436
    %v543 = vpack.c.b16 %v439, %v438
    %v544 = vpack.c.b16 %v441, %v440
    %v545 = vpack.c.b16 %v443, %v442
    %v546 = vpack.c.b16 %v445, %v444
    %v547 = vpack.c.b16 %v447, %v446
    %v548 = vpack.c.b16 %v449, %v448
    %v549 = vpack.c.b16 %v451, %v450
    %v550 = vpack.c.b16 %v453, %v452
    %v551 = vpack.c.b16 %v455, %v454
    %v552 = vpack.c.b16 %v457, %v456
    %v553 = vpack.c.b16 %v459, %v458
    %v554 = vpack.c.b16 %v461, %v460
    %v555 = vpack.c.b16 %v463, %v462
    %v556 = vpack.c.b16 %v465, %v464
    %v557 = vpack.c.b16 %v467, %v466
    %v558 = vpack.c.b16 %v469, %v468
    %v559 = vpack.c.b16 %v471, %v470
    %v560 = vpack.c.b16 %v473, %v472
    %v561 = vpack.c.b16 %v475, %v474
    %v562 = vpack.c.b16 %v477, %v476
    %v563 = vpack.c.b16 %v479, %v478
    %v564 = vpack.c.b16 %v481, %v480
    %v565 = vpack.c.b16 %v483, %v482
    %v566 = vpack.c.b16 %v485, %v484
    %v567 = vpack.c.b16 %v487, %v486
    %v568 = vpack.c.b16 %v489, %v488
    %v569 = vpack.c.b16 %v491, %v490
    %v570 = vpack.c.b16 %v493, %v492
    %v571 = vpack.c.b16 %v495, %v494
    %v572 = vpack.c.b16 %v497, %v496
    %v573 = vpack.c.b16 %v499, %v498
    %v574 = vpack.c.b16 %v501, %v500
    %v575 = vpack.c.b16 %v503, %v502
    %v576 = vpack.c.b16 %v505, %v504
    %v577 = vpack.c.b16 %v507, %v506
    %v578 = vpack.c.b16 %v509, %v508
    %v579 = vpack.c.b16 %v511, %v510
    %v580 = vpack.c.b16 %v513, %v512
    %v581 = vpack.c.b16 %v515, %v514
    %v582 = vpack.c.b16 %v517, %v516
    %v583 = vpack.c.b16 %v519, %v518
    %v584 = vpack.c.b16 %v521, %v520
    %v585 = vpack.c.b16 %v523, %v522
    %v586 = vpack.c.b16 %v525, %v524
    %v587 = vpack.c.b16 %v527, %v526
    %v588 = vpack.c.b16 %v529, %v528
    %v589 = vpack.c.b16 %v531, %v530
    %v590 = vpack.c.b16 %v533, %v532
    %v591 = vpack.c.b16 %v535, %v534
    %648 = vmatprep.subr.bf16.mxu0 0
    %649 = vmatpush1.bf16.msra.mxu0 %v536
    %650 = vmatprep.subr.bf16.mxu0 0
    %651 = vmatpush1.bf16.msra.mxu0 %v537
    %652 = vmatprep.subr.bf16.mxu0 0
    %653 = vmatpush1.bf16.msra.mxu0 %v538
    %654 = vmatprep.subr.bf16.mxu0 0
    %655 = vmatpush1.bf16.msra.mxu0 %v539
    %656 = vmatprep.subr.bf16.mxu0 0
    %657 = vmatpush1.bf16.msra.mxu0 %v540
    %658 = vmatprep.subr.bf16.mxu0 0
    %659 = vmatpush1.bf16.msra.mxu0 %v541
    %660 = vmatprep.subr.bf16.mxu0 0
    %661 = vmatpush1.bf16.msra.mxu0 %v542
    %662 = vmatprep.subr.bf16.mxu0 0
    %663 = vmatpush1.bf16.msra.mxu0 %v543
    %664 = vmatprep.subr.bf16.mxu0 0
    %665 = vmatpush1.bf16.msra.mxu0 %v544
    %666 = vmatprep.subr.bf16.mxu0 0
    %667 = vmatpush1.bf16.msra.mxu0 %v545
    %668 = vmatprep.subr.bf16.mxu0 0
    %669 = vmatpush1.bf16.msra.mxu0 %v546
    %670 = vmatprep.subr.bf16.mxu0 0
    %671 = vmatpush1.bf16.msra.mxu0 %v547
    %672 = vmatprep.subr.bf16.mxu0 0
    %673 = vmatpush1.bf16.msra.mxu0 %v548
    %674 = vmatprep.subr.bf16.mxu0 0
    %675 = vmatpush1.bf16.msra.mxu0 %v549
    %676 = vmatprep.subr.bf16.mxu0 0
    %677 = vmatpush1.bf16.msra.mxu0 %v550
    %678 = vmatprep.subr.bf16.mxu0 0
    %679 = vmatpush1.bf16.msra.mxu0 %v551
    %680 = vmatprep.mubr.bf16.mxu0 %v299
    %681 = vmatmul.mubr.bf16.gmra.mrb[0].mxu0 %v298
    %v682 = vpop.f32.mrb[0].mxu0
    %v683 = vadd.f32 %v285, %v682
    %v684 = vpop.f32.mrb[0].mxu0
    %v685 = vpop.f32.mrb[0].mxu0
    %v686 = vpop.f32.mrb[0].mxu0
    %687 = vdwg.mxu0
    %688 = vmatprep.subr.bf16.mxu0 0
    %689 = vmatpush1.bf16.msra.mxu0 %v552
    %690 = vmatprep.subr.bf16.mxu0 0
    %691 = vmatpush1.bf16.msra.mxu0 %v553
    %692 = vmatprep.subr.bf16.mxu0 0
    %693 = vmatpush1.bf16.msra.mxu0 %v554
    %694 = vmatprep.subr.bf16.mxu0 0
    %695 = vmatpush1.bf16.msra.mxu0 %v555
    %696 = vmatprep.subr.bf16.mxu0 0
    %697 = vmatpush1.bf16.msra.mxu0 %v556
    %698 = vmatprep.subr.bf16.mxu0 0
    %699 = vmatpush1.bf16.msra.mxu0 %v557
    %700 = vmatprep.subr.bf16.mxu0 0
    %701 = vmatpush1.bf16.msra.mxu0 %v558
    %702 = vmatprep.subr.bf16.mxu0 0
    %703 = vmatpush1.bf16.msra.mxu0 %v559
    %704 = vmatprep.subr.bf16.mxu0 0
    %705 = vmatpush1.bf16.msra.mxu0 %v560
    %706 = vmatprep.subr.bf16.mxu0 0
    %707 = vmatpush1.bf16.msra.mxu0 %v561
    %708 = vmatprep.subr.bf16.mxu0 0
    %709 = vmatpush1.bf16.msra.mxu0 %v562
    %710 = vmatprep.subr.bf16.mxu0 0
    %711 = vmatpush1.bf16.msra.mxu0 %v563
    %712 = vmatprep.subr.bf16.mxu0 0
    %713 = vmatpush1.bf16.msra.mxu0 %v564
    %714 = vmatprep.subr.bf16.mxu0 0
    %715 = vmatpush1.bf16.msra.mxu0 %v565
    %716 = vmatprep.subr.bf16.mxu0 0
    %717 = vmatpush1.bf16.msra.mxu0 %v566
    %718 = vmatprep.subr.bf16.mxu0 0
    %719 = vmatpush1.bf16.msra.mxu0 %v567
    %720 = vmatprep.mubr.bf16.mxu0 %v301
    %721 = vmatmul.mubr.bf16.gmra.mrb[0].mxu0 %v300
    %v722 = vpop.f32.mrb[0].mxu0
    %v723 = vadd.f32 %v683, %v722
    %v724 = vpop.f32.mrb[0].mxu0
    %v725 = vpop.f32.mrb[0].mxu0
    %v726 = vpop.f32.mrb[0].mxu0
    %727 = vdwg.mxu0
    %728 = vmatprep.subr.bf16.mxu0 0
    %729 = vmatpush1.bf16.msra.mxu0 %v568
    %730 = vmatprep.subr.bf16.mxu0 0
    %731 = vmatpush1.bf16.msra.mxu0 %v569
    %732 = vmatprep.subr.bf16.mxu0 0
    %733 = vmatpush1.bf16.msra.mxu0 %v570
    %734 = vmatprep.subr.bf16.mxu0 0
    %735 = vmatpush1.bf16.msra.mxu0 %v571
    %736 = vmatprep.subr.bf16.mxu0 0
    %737 = vmatpush1.bf16.msra.mxu0 %v572
    %738 = vmatprep.subr.bf16.mxu0 0
    %739 = vmatpush1.bf16.msra.mxu0 %v573
    %740 = vmatprep.subr.bf16.mxu0 0
    %741 = vmatpush1.bf16.msra.mxu0 %v574
    %742 = vmatprep.subr.bf16.mxu0 0
    %743 = vmatpush1.bf16.msra.mxu0 %v575
    %744 = vmatprep.subr.bf16.mxu0 0
    %745 = vmatpush1.bf16.msra.mxu0 %v576
    %746 = vmatprep.subr.bf16.mxu0 0
    %747 = vmatpush1.bf16.msra.mxu0 %v577
    %748 = vmatprep.subr.bf16.mxu0 0
    %749 = vmatpush1.bf16.msra.mxu0 %v578
    %750 = vmatprep.subr.bf16.mxu0 0
    %751 = vmatpush1.bf16.msra.mxu0 %v579
    %752 = vmatprep.subr.bf16.mxu0 0
    %753 = vmatpush1.bf16.msra.mxu0 %v580
    %754 = vmatprep.subr.bf16.mxu0 0
    %755 = vmatpush1.bf16.msra.mxu0 %v581
    %756 = vmatprep.subr.bf16.mxu0 0
    %757 = vmatpush1.bf16.msra.mxu0 %v582
    %758 = vmatprep.subr.bf16.mxu0 0
    %759 = vmatpush1.bf16.msra.mxu0 %v583
    %760 = vmatprep.mubr.bf16.mxu0 %v303
    %761 = vmatmul.mubr.bf16.gmra.mrb[0].mxu0 %v302
    %v762 = vpop.f32.mrb[0].mxu0
    %v763 = vadd.f32 %v723, %v762
    %v764 = vpop.f32.mrb[0].mxu0
    %v765 = vpop.f32.mrb[0].mxu0
    %v766 = vpop.f32.mrb[0].mxu0
    %767 = vdwg.mxu0
    %768 = vmatprep.subr.bf16.mxu0 0
    %769 = vmatpush1.bf16.msra.mxu0 %v584
    %770 = vmatprep.subr.bf16.mxu0 0
    %771 = vmatpush1.bf16.msra.mxu0 %v585
    %772 = vmatprep.subr.bf16.mxu0 0
    %773 = vmatpush1.bf16.msra.mxu0 %v586
    %774 = vmatprep.subr.bf16.mxu0 0
    %775 = vmatpush1.bf16.msra.mxu0 %v587
    %776 = vmatprep.subr.bf16.mxu0 0
    %777 = vmatpush1.bf16.msra.mxu0 %v588
    %778 = vmatprep.subr.bf16.mxu0 0
    %779 = vmatpush1.bf16.msra.mxu0 %v589
    %780 = vmatprep.subr.bf16.mxu0 0
    %781 = vmatpush1.bf16.msra.mxu0 %v590
    %782 = vmatprep.subr.bf16.mxu0 0
    %783 = vmatpush1.bf16.msra.mxu0 %v591
    %784 = vmatprep.subr.bf16.mxu0 0
    %785 = vmatpush1.bf16.msra.mxu0 0
    %786 = vmatprep.subr.bf16.mxu0 0
    %787 = vmatpush1.bf16.msra.mxu0 0
    %788 = vmatprep.subr.bf16.mxu0 0
    %789 = vmatpush1.bf16.msra.mxu0 0
    %790 = vmatprep.subr.bf16.mxu0 0
    %791 = vmatpush1.bf16.msra.mxu0 0
    %792 = vmatprep.subr.bf16.mxu0 0
    %793 = vmatpush1.bf16.msra.mxu0 0
    %794 = vmatprep.subr.bf16.mxu0 0
    %795 = vmatpush1.bf16.msra.mxu0 0
    %796 = vmatprep.subr.bf16.mxu0 0
    %797 = vmatpush1.bf16.msra.mxu0 0
    %798 = vmatprep.subr.bf16.mxu0 0
    %799 = vmatpush1.bf16.msra.mxu0 0
    %800 = vmatprep.mubr.bf16.mxu0 0
    %801 = vmatmul.mubr.bf16.gmra.mrb[0].mxu0 %v304
    %v802 = vpop.f32.mrb[0].mxu0
    %v803 = vadd.f32 %v763, %v802
    %v804 = vpop.f32.mrb[0].mxu0
    %v805 = vpop.f32.mrb[0].mxu0
    %v806 = vpop.f32.mrb[0].mxu0
    %807 = vdwg.mxu0
    %v808 = vmax.f32 %v803, 0.0
    %v809 = vpack.c.bf16 %v808, %v808
    %v810 = vld [vmem:[%s3] sm:$0xf]
    %v811 = vld [vmem:[%s3 + $0x4] sm:$0xf]
    %v812 = vld [vmem:[%s3 + $0x8] sm:$0xf]
    %v813 = vld [vmem:[%s3 + $0xc] sm:$0xf]
    %v814 = vld [vmem:[%s3 + $0x10] sm:$0xf]
    %v815 = vld [vmem:[%s3 + $0x14] sm:$0xf]
    %v816 = vld [vmem:[%s3 + $0x18] sm:$0xf]
    %v817 = vld [vmem:[%s3 + $0x1c] sm:$0xf]
    %v818 = vld [vmem:[%s3 + $0x20] sm:$0xf]
    %v819 = vld [vmem:[%s3 + $0x24] sm:$0xf]
    %v820 = vld [vmem:[%s3 + $0x28] sm:$0xf]
    %v821 = vld [vmem:[%s3 + $0x2c] sm:$0xf]
    %v822 = vld [vmem:[%s3 + $0x30] sm:$0xf]
    %v823 = vld [vmem:[%s3 + $0x34] sm:$0xf]
    %v824 = vld [vmem:[%s3 + $0x38] sm:$0xf]
    %v825 = vld [vmem:[%s3 + $0x3c] sm:$0xf]
    %v826 = vld [vmem:[#allocation4] sm:$0x1]
    %v828 = vlaneseq
    %v829 = vshrl.u32 %v828, 7
    %v830 = vsub.s32 0, %v829
    %v831 = vrot.slane %v826, %v830
    %v849 = vunpack.c.l.b16 %v810
    %v850 = vunpack.c.l.b16 %v811
    %v851 = vunpack.c.l.b16 %v812
    %v852 = vunpack.c.l.b16 %v813
    %v853 = vunpack.c.l.b16 %v814
    %v854 = vunpack.c.l.b16 %v815
    %v855 = vunpack.c.l.b16 %v816
    %v856 = vunpack.c.l.b16 %v817
    %v857 = vunpack.c.l.b16 %v818
    %v858 = vunpack.c.l.b16 %v819
    %v859 = vunpack.c.l.b16 %v820
    %v860 = vunpack.c.l.b16 %v821
    %v861 = vunpack.c.l.b16 %v822
    %v862 = vunpack.c.l.b16 %v823
    %v863 = vunpack.c.l.b16 %v824
    %v864 = vunpack.c.l.b16 %v825
    %v865 = vpack.c.b16 %v850, %v849
    %v866 = vpack.c.b16 %v852, %v851
    %v867 = vpack.c.b16 %v854, %v853
    %v868 = vpack.c.b16 %v856, %v855
    %v869 = vpack.c.b16 %v858, %v857
    %v870 = vpack.c.b16 %v860, %v859
    %v871 = vpack.c.b16 %v862, %v861
    %v872 = vpack.c.b16 %v864, %v863
    %881 = vmatprep.subr.bf16.mxu0 0
    %882 = vmatpush1.bf16.msra.mxu0 %v865
    %883 = vmatprep.subr.bf16.mxu0 0
    %884 = vmatpush1.bf16.msra.mxu0 %v866
    %885 = vmatprep.subr.bf16.mxu0 0
    %886 = vmatpush1.bf16.msra.mxu0 %v867
    %887 = vmatprep.subr.bf16.mxu0 0
    %888 = vmatpush1.bf16.msra.mxu0 %v868
    %889 = vmatprep.subr.bf16.mxu0 0
    %890 = vmatpush1.bf16.msra.mxu0 %v869
    %891 = vmatprep.subr.bf16.mxu0 0
    %892 = vmatpush1.bf16.msra.mxu0 %v870
    %893 = vmatprep.subr.bf16.mxu0 0
    %894 = vmatpush1.bf16.msra.mxu0 %v871
    %895 = vmatprep.subr.bf16.mxu0 0
    %896 = vmatpush1.bf16.msra.mxu0 %v872
    %897 = vmatprep.subr.bf16.mxu0 0
    %898 = vmatpush1.bf16.msra.mxu0 0
    %899 = vmatprep.subr.bf16.mxu0 0
    %900 = vmatpush1.bf16.msra.mxu0 0
    %901 = vmatprep.subr.bf16.mxu0 0
    %902 = vmatpush1.bf16.msra.mxu0 0
    %903 = vmatprep.subr.bf16.mxu0 0
    %904 = vmatpush1.bf16.msra.mxu0 0
    %905 = vmatprep.subr.bf16.mxu0 0
    %906 = vmatpush1.bf16.msra.mxu0 0
    %907 = vmatprep.subr.bf16.mxu0 0
    %908 = vmatpush1.bf16.msra.mxu0 0
    %909 = vmatprep.subr.bf16.mxu0 0
    %910 = vmatpush1.bf16.msra.mxu0 0
    %911 = vmatprep.subr.bf16.mxu0 0
    %912 = vmatpush1.bf16.msra.mxu0 0
    %913 = vmatprep.mubr.bf16.mxu0 0
    %914 = vmatmul.mubr.bf16.gmra.mrb[0].mxu0 %v809
    %v915 = vpop.f32.mrb[0].mxu0
    %v916 = vadd.f32 %v831, %v915
    %v917 = vpop.f32.mrb[0].mxu0
    %v918 = vpop.f32.mrb[0].mxu0
    %v919 = vpop.f32.mrb[0].mxu0
    %920 = vdwg.mxu0
    %v921 = vmax.f32 %v916, 0.0
    %v922 = vpack.c.bf16 %v921, %v921
    %v923 = vld [vmem:[#allocation6] sm:$0xf]
    %v924 = vld [vmem:[#allocation6 + $0x4] sm:$0xf]
    %v925 = vld [vmem:[#allocation6 + $0x8] sm:$0xf]
    %v926 = vld [vmem:[#allocation6 + $0xc] sm:$0xf]
    %v927 = vld [vmem:[#allocation6 + $0x10] sm:$0xf]
    %v928 = vld [vmem:[#allocation6 + $0x14] sm:$0xf]
    %v929 = vld [vmem:[#allocation6 + $0x18] sm:$0xf]
    %v930 = vld [vmem:[#allocation6 + $0x1c] sm:$0xf]
    %v931 = vld [vmem:[#allocation6 + $0x20] sm:$0xf]
    %v932 = vld [vmem:[#allocation6 + $0x24] sm:$0xf]
    %v933 = vld [vmem:[#allocation6 + $0x28] sm:$0xf]
    %v934 = vld [vmem:[#allocation6 + $0x2c] sm:$0xf]
    %v935 = vld [vmem:[#allocation6 + $0x30] sm:$0xf]
    %v936 = vld [vmem:[#allocation6 + $0x34] sm:$0xf]
    %v937 = vld [vmem:[#allocation6 + $0x38] sm:$0xf]
    %v938 = vld [vmem:[#allocation6 + $0x3c] sm:$0xf]
    %v939 = vld [vmem:[%s6] sm:$0x1]
    %v941 = vlaneseq
    %v942 = vshrl.u32 %v941, 7
    %v943 = vsub.s32 0, %v942
    %v944 = vrot.slane %v939, %v943
    %v962 = vunpack.c.l.b16 %v923
    %v963 = vunpack.c.l.b16 %v924
    %v964 = vunpack.c.l.b16 %v925
    %v965 = vunpack.c.l.b16 %v926
    %v966 = vunpack.c.l.b16 %v927
    %v967 = vunpack.c.l.b16 %v928
    %v968 = vunpack.c.l.b16 %v929
    %v969 = vunpack.c.l.b16 %v930
    %v970 = vunpack.c.l.b16 %v931
    %v971 = vunpack.c.l.b16 %v932
    %v972 = vunpack.c.l.b16 %v933
    %v973 = vunpack.c.l.b16 %v934
    %v974 = vunpack.c.l.b16 %v935
    %v975 = vunpack.c.l.b16 %v936
    %v976 = vunpack.c.l.b16 %v937
    %v977 = vunpack.c.l.b16 %v938
    %v978 = vpack.c.b16 %v963, %v962
    %v979 = vpack.c.b16 %v965, %v964
    %v980 = vpack.c.b16 %v967, %v966
    %v981 = vpack.c.b16 %v969, %v968
    %v982 = vpack.c.b16 %v971, %v970
    %v983 = vpack.c.b16 %v973, %v972
    %v984 = vpack.c.b16 %v975, %v974
    %v985 = vpack.c.b16 %v977, %v976
    %994 = vmatprep.subr.bf16.mxu0 0
    %995 = vmatpush1.bf16.msra.mxu0 %v978
    %996 = vmatprep.subr.bf16.mxu0 0
    %997 = vmatpush1.bf16.msra.mxu0 %v979
    %998 = vmatprep.subr.bf16.mxu0 0
    %999 = vmatpush1.bf16.msra.mxu0 %v980
    %1000 = vmatprep.subr.bf16.mxu0 0
    %1001 = vmatpush1.bf16.msra.mxu0 %v981
    %1002 = vmatprep.subr.bf16.mxu0 0
    %1003 = vmatpush1.bf16.msra.mxu0 %v982
    %1004 = vmatprep.subr.bf16.mxu0 0
    %1005 = vmatpush1.bf16.msra.mxu0 %v983
    %1006 = vmatprep.subr.bf16.mxu0 0
    %1007 = vmatpush1.bf16.msra.mxu0 %v984
    %1008 = vmatprep.subr.bf16.mxu0 0
    %1009 = vmatpush1.bf16.msra.mxu0 %v985
    %1010 = vmatprep.subr.bf16.mxu0 0
    %1011 = vmatpush1.bf16.msra.mxu0 0
    %1012 = vmatprep.subr.bf16.mxu0 0
    %1013 = vmatpush1.bf16.msra.mxu0 0
    %1014 = vmatprep.subr.bf16.mxu0 0
    %1015 = vmatpush1.bf16.msra.mxu0 0
    %1016 = vmatprep.subr.bf16.mxu0 0
    %1017 = vmatpush1.bf16.msra.mxu0 0
    %1018 = vmatprep.subr.bf16.mxu0 0
    %1019 = vmatpush1.bf16.msra.mxu0 0
    %1020 = vmatprep.subr.bf16.mxu0 0
    %1021 = vmatpush1.bf16.msra.mxu0 0
    %1022 = vmatprep.subr.bf16.mxu0 0
    %1023 = vmatpush1.bf16.msra.mxu0 0
    %1024 = vmatprep.subr.bf16.mxu0 0
    %1025 = vmatpush1.bf16.msra.mxu0 0
    %1026 = vmatprep.mubr.bf16.mxu0 0
    %1027 = vmatmul.mubr.bf16.gmra.mrb[0].mxu0 %v922
    %v1028 = vpop.f32.mrb[0].mxu0
    %v1029 = vadd.f32 %v944, %v1028
    %v1030 = vpop.f32.mrb[0].mxu0
    %v1031 = vpop.f32.mrb[0].mxu0
    %v1032 = vpop.f32.mrb[0].mxu0
    %1033 = vdwg.mxu0
    %v1034 = vmax.f32 %v1029, 0.0
    %v1035 = vpack.c.bf16 %v1034, %v1034
    %v1036 = vld [vmem:[#allocation7] sm:$0xf]
    %v1037 = vld [vmem:[#allocation7 + $0x4] sm:$0xf]
    %v1038 = vld [vmem:[#allocation7 + $0x8] sm:$0xf]
    %v1039 = vld [vmem:[#allocation7 + $0xc] sm:$0xf]
    %v1040 = vld [vmem:[#allocation7 + $0x10] sm:$0xf]
    %v1041 = vld [vmem:[#allocation7 + $0x14] sm:$0xf]
    %v1042 = vld [vmem:[#allocation7 + $0x18] sm:$0xf]
    %v1043 = vld [vmem:[#allocation7 + $0x1c] sm:$0xf]
    %v1044 = vld [vmem:[#allocation7 + $0x20] sm:$0xf]
    %v1045 = vld [vmem:[#allocation7 + $0x24] sm:$0xf]
    %v1046 = vld [vmem:[#allocation7 + $0x28] sm:$0xf]
    %v1047 = vld [vmem:[#allocation7 + $0x2c] sm:$0xf]
    %v1048 = vld [vmem:[#allocation7 + $0x30] sm:$0xf]
    %v1049 = vld [vmem:[#allocation7 + $0x34] sm:$0xf]
    %v1050 = vld [vmem:[#allocation7 + $0x38] sm:$0xf]
    %v1051 = vld [vmem:[#allocation7 + $0x3c] sm:$0xf]
    %v1052 = vld [vmem:[%s8] sm:$0x1]
    %v1054 = vlaneseq
    %v1055 = vshrl.u32 %v1054, 7
    %v1056 = vsub.s32 0, %v1055
    %v1057 = vrot.slane %v1052, %v1056
    %v1075 = vunpack.c.l.b16 %v1036
    %v1076 = vunpack.c.l.b16 %v1037
    %v1077 = vunpack.c.l.b16 %v1038
    %v1078 = vunpack.c.l.b16 %v1039
    %v1079 = vunpack.c.l.b16 %v1040
    %v1080 = vunpack.c.l.b16 %v1041
    %v1081 = vunpack.c.l.b16 %v1042
    %v1082 = vunpack.c.l.b16 %v1043
    %v1083 = vunpack.c.l.b16 %v1044
    %v1084 = vunpack.c.l.b16 %v1045
    %v1085 = vunpack.c.l.b16 %v1046
    %v1086 = vunpack.c.l.b16 %v1047
    %v1087 = vunpack.c.l.b16 %v1048
    %v1088 = vunpack.c.l.b16 %v1049
    %v1089 = vunpack.c.l.b16 %v1050
    %v1090 = vunpack.c.l.b16 %v1051
    %v1091 = vpack.c.b16 %v1076, %v1075
    %v1092 = vpack.c.b16 %v1078, %v1077
    %v1093 = vpack.c.b16 %v1080, %v1079
    %v1094 = vpack.c.b16 %v1082, %v1081
    %v1095 = vpack.c.b16 %v1084, %v1083
    %v1096 = vpack.c.b16 %v1086, %v1085
    %v1097 = vpack.c.b16 %v1088, %v1087
    %v1098 = vpack.c.b16 %v1090, %v1089
    %1107 = vmatprep.subr.bf16.mxu0 0
    %1108 = vmatpush1.bf16.msra.mxu0 %v1091
    %1109 = vmatprep.subr.bf16.mxu0 0
    %1110 = vmatpush1.bf16.msra.mxu0 %v1092
    %1111 = vmatprep.subr.bf16.mxu0 0
    %1112 = vmatpush1.bf16.msra.mxu0 %v1093
    %1113 = vmatprep.subr.bf16.mxu0 0
    %1114 = vmatpush1.bf16.msra.mxu0 %v1094
    %1115 = vmatprep.subr.bf16.mxu0 0
    %1116 = vmatpush1.bf16.msra.mxu0 %v1095
    %1117 = vmatprep.subr.bf16.mxu0 0
    %1118 = vmatpush1.bf16.msra.mxu0 %v1096
    %1119 = vmatprep.subr.bf16.mxu0 0
    %1120 = vmatpush1.bf16.msra.mxu0 %v1097
    %1121 = vmatprep.subr.bf16.mxu0 0
    %1122 = vmatpush1.bf16.msra.mxu0 %v1098
    %1123 = vmatprep.subr.bf16.mxu0 0
    %1124 = vmatpush1.bf16.msra.mxu0 0
    %1125 = vmatprep.subr.bf16.mxu0 0
    %1126 = vmatpush1.bf16.msra.mxu0 0
    %1127 = vmatprep.subr.bf16.mxu0 0
    %1128 = vmatpush1.bf16.msra.mxu0 0
    %1129 = vmatprep.subr.bf16.mxu0 0
    %1130 = vmatpush1.bf16.msra.mxu0 0
    %1131 = vmatprep.subr.bf16.mxu0 0
    %1132 = vmatpush1.bf16.msra.mxu0 0
    %1133 = vmatprep.subr.bf16.mxu0 0
    %1134 = vmatpush1.bf16.msra.mxu0 0
    %1135 = vmatprep.subr.bf16.mxu0 0
    %1136 = vmatpush1.bf16.msra.mxu0 0
    %1137 = vmatprep.subr.bf16.mxu0 0
    %1138 = vmatpush1.bf16.msra.mxu0 0
    %1139 = vmatprep.mubr.bf16.mxu0 0
    %1140 = vmatmul.mubr.bf16.gmra.mrb[0].mxu0 %v1035
    %v1141 = vpop.f32.mrb[0].mxu0
    %v1142 = vadd.f32 %v1057, %v1141
    %v1143 = vpop.f32.mrb[0].mxu0
    %v1144 = vpop.f32.mrb[0].mxu0
    %v1145 = vpop.f32.mrb[0].mxu0
    %1146 = vdwg.mxu0
    %v1147 = vpack.c.bf16 %v1142, %v1142
    %v1148 = vld [vmem:[#allocation9] sm:$0xf]
    %v1149 = vld [vmem:[#allocation9 + $0x4] sm:$0xf]
    %v1150 = vld [vmem:[#allocation9 + $0x8] sm:$0xf]
    %v1151 = vld [vmem:[#allocation9 + $0xc] sm:$0xf]
    %v1152 = vld [vmem:[#allocation9 + $0x10] sm:$0xf]
    %v1153 = vld [vmem:[#allocation9 + $0x14] sm:$0xf]
    %v1154 = vld [vmem:[#allocation9 + $0x18] sm:$0xf]
    %v1155 = vld [vmem:[#allocation9 + $0x1c] sm:$0xf]
    %v1156 = vld [vmem:[#allocation9 + $0x20] sm:$0xf]
    %v1157 = vld [vmem:[#allocation9 + $0x24] sm:$0xf]
    %v1158 = vld [vmem:[#allocation9 + $0x28] sm:$0xf]
    %v1159 = vld [vmem:[#allocation9 + $0x2c] sm:$0xf]
    %v1160 = vld [vmem:[#allocation9 + $0x30] sm:$0xf]
    %v1161 = vld [vmem:[#allocation9 + $0x34] sm:$0xf]
    %v1162 = vld [vmem:[#allocation9 + $0x38] sm:$0xf]
    %v1163 = vld [vmem:[#allocation9 + $0x3c] sm:$0xf]
    %v1164 = vld [vmem:[%s10] sm:$0x1]
    %v1166 = vlaneseq
    %v1167 = vshrl.u32 %v1166, 7
    %v1168 = vsub.s32 0, %v1167
    %v1169 = vrot.slane %v1164, %v1168
    %v1187 = vunpack.c.l.b16 %v1148
    %v1188 = vunpack.c.l.b16 %v1149
    %v1189 = vunpack.c.l.b16 %v1150
    %v1190 = vunpack.c.l.b16 %v1151
    %v1191 = vunpack.c.l.b16 %v1152
    %v1192 = vunpack.c.l.b16 %v1153
    %v1193 = vunpack.c.l.b16 %v1154
    %v1194 = vunpack.c.l.b16 %v1155
    %v1195 = vunpack.c.l.b16 %v1156
    %v1196 = vunpack.c.l.b16 %v1157
    %v1197 = vunpack.c.l.b16 %v1158
    %v1198 = vunpack.c.l.b16 %v1159
    %v1199 = vunpack.c.l.b16 %v1160
    %v1200 = vunpack.c.l.b16 %v1161
    %v1201 = vunpack.c.l.b16 %v1162
    %v1202 = vunpack.c.l.b16 %v1163
    %v1203 = vpack.c.b16 %v1188, %v1187
    %v1204 = vpack.c.b16 %v1190, %v1189
    %v1205 = vpack.c.b16 %v1192, %v1191
    %v1206 = vpack.c.b16 %v1194, %v1193
    %v1207 = vpack.c.b16 %v1196, %v1195
    %v1208 = vpack.c.b16 %v1198, %v1197
    %v1209 = vpack.c.b16 %v1200, %v1199
    %v1210 = vpack.c.b16 %v1202, %v1201
    %1219 = vmatprep.subr.bf16.mxu0 0
    %1220 = vmatpush1.bf16.msra.mxu0 %v1203
    %1221 = vmatprep.subr.bf16.mxu0 0
    %1222 = vmatpush1.bf16.msra.mxu0 %v1204
    %1223 = vmatprep.subr.bf16.mxu0 0
    %1224 = vmatpush1.bf16.msra.mxu0 %v1205
    %1225 = vmatprep.subr.bf16.mxu0 0
    %1226 = vmatpush1.bf16.msra.mxu0 %v1206
    %1227 = vmatprep.subr.bf16.mxu0 0
    %1228 = vmatpush1.bf16.msra.mxu0 %v1207
    %1229 = vmatprep.subr.bf16.mxu0 0
    %1230 = vmatpush1.bf16.msra.mxu0 %v1208
    %1231 = vmatprep.subr.bf16.mxu0 0
    %1232 = vmatpush1.bf16.msra.mxu0 %v1209
    %1233 = vmatprep.subr.bf16.mxu0 0
    %1234 = vmatpush1.bf16.msra.mxu0 %v1210
    %1235 = vmatprep.subr.bf16.mxu0 0
    %1236 = vmatpush1.bf16.msra.mxu0 0
    %1237 = vmatprep.subr.bf16.mxu0 0
    %1238 = vmatpush1.bf16.msra.mxu0 0
    %1239 = vmatprep.subr.bf16.mxu0 0
    %1240 = vmatpush1.bf16.msra.mxu0 0
    %1241 = vmatprep.subr.bf16.mxu0 0
    %1242 = vmatpush1.bf16.msra.mxu0 0
    %1243 = vmatprep.subr.bf16.mxu0 0
    %1244 = vmatpush1.bf16.msra.mxu0 0
    %1245 = vmatprep.subr.bf16.mxu0 0
    %1246 = vmatpush1.bf16.msra.mxu0 0
    %1247 = vmatprep.subr.bf16.mxu0 0
    %1248 = vmatpush1.bf16.msra.mxu0 0
    %1249 = vmatprep.subr.bf16.mxu0 0
    %1250 = vmatpush1.bf16.msra.mxu0 0
    %1251 = vmatprep.mubr.bf16.mxu0 0
    %1252 = vmatmul.mubr.bf16.gmra.mrb[0].mxu0 %v1147
    %v1253 = vpop.f32.mrb[0].mxu0
    %v1254 = vadd.f32 %v1169, %v1253
    %v1255 = vpop.f32.mrb[0].mxu0
    %v1256 = vpop.f32.mrb[0].mxu0
    %v1257 = vpop.f32.mrb[0].mxu0
    %1258 = vdwg.mxu0
    %v1259 = vmax.f32 %v1254, 0.0
    %v1260 = vpack.c.bf16 %v1259, %v1259
    %v1261 = vld [vmem:[#allocation10] sm:$0xf]
    %v1262 = vld [vmem:[#allocation10 + $0x4] sm:$0xf]
    %v1263 = vld [vmem:[#allocation10 + $0x8] sm:$0xf]
    %v1264 = vld [vmem:[#allocation10 + $0xc] sm:$0xf]
    %v1265 = vld [vmem:[#allocation10 + $0x10] sm:$0xf]
    %v1266 = vld [vmem:[#allocation10 + $0x14] sm:$0xf]
    %v1267 = vld [vmem:[#allocation10 + $0x18] sm:$0xf]
    %v1268 = vld [vmem:[#allocation10 + $0x1c] sm:$0xf]
    %v1269 = vld [vmem:[#allocation10 + $0x20] sm:$0xf]
    %v1270 = vld [vmem:[#allocation10 + $0x24] sm:$0xf]
    %v1271 = vld [vmem:[#allocation10 + $0x28] sm:$0xf]
    %v1272 = vld [vmem:[#allocation10 + $0x2c] sm:$0xf]
    %v1273 = vld [vmem:[#allocation10 + $0x30] sm:$0xf]
    %v1274 = vld [vmem:[#allocation10 + $0x34] sm:$0xf]
    %v1275 = vld [vmem:[#allocation10 + $0x38] sm:$0xf]
    %v1276 = vld [vmem:[#allocation10 + $0x3c] sm:$0xf]
    %v1277 = vld [vmem:[%s12] sm:$0x1]
    %v1279 = vlaneseq
    %v1280 = vshrl.u32 %v1279, 7
    %v1281 = vsub.s32 0, %v1280
    %v1282 = vrot.slane %v1277, %v1281
    %v1300 = vunpack.c.l.b16 %v1261
    %v1301 = vunpack.c.l.b16 %v1262
    %v1302 = vunpack.c.l.b16 %v1263
    %v1303 = vunpack.c.l.b16 %v1264
    %v1304 = vunpack.c.l.b16 %v1265
    %v1305 = vunpack.c.l.b16 %v1266
    %v1306 = vunpack.c.l.b16 %v1267
    %v1307 = vunpack.c.l.b16 %v1268
    %v1308 = vunpack.c.l.b16 %v1269
    %v1309 = vunpack.c.l.b16 %v1270
    %v1310 = vunpack.c.l.b16 %v1271
    %v1311 = vunpack.c.l.b16 %v1272
    %v1312 = vunpack.c.l.b16 %v1273
    %v1313 = vunpack.c.l.b16 %v1274
    %v1314 = vunpack.c.l.b16 %v1275
    %v1315 = vunpack.c.l.b16 %v1276
    %v1316 = vpack.c.b16 %v1301, %v1300
    %v1317 = vpack.c.b16 %v1303, %v1302
    %v1318 = vpack.c.b16 %v1305, %v1304
    %v1319 = vpack.c.b16 %v1307, %v1306
    %v1320 = vpack.c.b16 %v1309, %v1308
    %v1321 = vpack.c.b16 %v1311, %v1310
    %v1322 = vpack.c.b16 %v1313, %v1312
    %v1323 = vpack.c.b16 %v1315, %v1314
    %1332 = vmatprep.subr.bf16.mxu0 0
    %1333 = vmatpush1.bf16.msra.mxu0 %v1316
    %1334 = vmatprep.subr.bf16.mxu0 0
    %1335 = vmatpush1.bf16.msra.mxu0 %v1317
    %1336 = vmatprep.subr.bf16.mxu0 0
    %1337 = vmatpush1.bf16.msra.mxu0 %v1318
    %1338 = vmatprep.subr.bf16.mxu0 0
    %1339 = vmatpush1.bf16.msra.mxu0 %v1319
    %1340 = vmatprep.subr.bf16.mxu0 0
    %1341 = vmatpush1.bf16.msra.mxu0 %v1320
    %1342 = vmatprep.subr.bf16.mxu0 0
    %1343 = vmatpush1.bf16.msra.mxu0 %v1321
    %1344 = vmatprep.subr.bf16.mxu0 0
    %1345 = vmatpush1.bf16.msra.mxu0 %v1322
    %1346 = vmatprep.subr.bf16.mxu0 0
    %1347 = vmatpush1.bf16.msra.mxu0 %v1323
    %1348 = vmatprep.subr.bf16.mxu0 0
    %1349 = vmatpush1.bf16.msra.mxu0 0
    %1350 = vmatprep.subr.bf16.mxu0 0
    %1351 = vmatpush1.bf16.msra.mxu0 0
    %1352 = vmatprep.subr.bf16.mxu0 0
    %1353 = vmatpush1.bf16.msra.mxu0 0
    %1354 = vmatprep.subr.bf16.mxu0 0
    %1355 = vmatpush1.bf16.msra.mxu0 0
    %1356 = vmatprep.subr.bf16.mxu0 0
    %1357 = vmatpush1.bf16.msra.mxu0 0
    %1358 = vmatprep.subr.bf16.mxu0 0
    %1359 = vmatpush1.bf16.msra.mxu0 0
    %1360 = vmatprep.subr.bf16.mxu0 0
    %1361 = vmatpush1.bf16.msra.mxu0 0
    %1362 = vmatprep.subr.bf16.mxu0 0
    %1363 = vmatpush1.bf16.msra.mxu0 0
    %1364 = vmatprep.mubr.bf16.mxu0 0
    %1365 = vmatmul.mubr.bf16.gmra.mrb[0].mxu0 %v1260
    %v1366 = vpop.f32.mrb[0].mxu0
    %v1367 = vadd.f32 %v1282, %v1366
    %v1368 = vpop.f32.mrb[0].mxu0
    %v1369 = vpop.f32.mrb[0].mxu0
    %v1370 = vpop.f32.mrb[0].mxu0
    %1371 = vdwg.mxu0
    %v1372 = vmax.f32 %v1367, 0.0
    %v1373 = vpack.c.bf16 %v1372, %v1372
    %v1374 = vld [vmem:[#allocation12] sm:$0xf]
    %v1375 = vld [vmem:[#allocation12 + $0x4] sm:$0xf]
    %v1376 = vld [vmem:[#allocation12 + $0x8] sm:$0xf]
    %v1377 = vld [vmem:[#allocation12 + $0xc] sm:$0xf]
    %v1378 = vld [vmem:[#allocation12 + $0x10] sm:$0xf]
    %v1379 = vld [vmem:[#allocation12 + $0x14] sm:$0xf]
    %v1380 = vld [vmem:[#allocation12 + $0x18] sm:$0xf]
    %v1381 = vld [vmem:[#allocation12 + $0x1c] sm:$0xf]
    %v1382 = vld [vmem:[#allocation12 + $0x20] sm:$0xf]
    %v1383 = vld [vmem:[#allocation12 + $0x24] sm:$0xf]
    %v1384 = vld [vmem:[#allocation12 + $0x28] sm:$0xf]
    %v1385 = vld [vmem:[#allocation12 + $0x2c] sm:$0xf]
    %v1386 = vld [vmem:[#allocation12 + $0x30] sm:$0xf]
    %v1387 = vld [vmem:[#allocation12 + $0x34] sm:$0xf]
    %v1388 = vld [vmem:[#allocation12 + $0x38] sm:$0xf]
    %v1389 = vld [vmem:[#allocation12 + $0x3c] sm:$0xf]
    %v1390 = vld [vmem:[%s14] sm:$0x1]
    %v1392 = vlaneseq
    %v1393 = vshrl.u32 %v1392, 7
    %v1394 = vsub.s32 0, %v1393
    %v1395 = vrot.slane %v1390, %v1394
    %v1413 = vunpack.c.l.b16 %v1374
    %v1414 = vunpack.c.l.b16 %v1375
    %v1415 = vunpack.c.l.b16 %v1376
    %v1416 = vunpack.c.l.b16 %v1377
    %v1417 = vunpack.c.l.b16 %v1378
    %v1418 = vunpack.c.l.b16 %v1379
    %v1419 = vunpack.c.l.b16 %v1380
    %v1420 = vunpack.c.l.b16 %v1381
    %v1421 = vunpack.c.l.b16 %v1382
    %v1422 = vunpack.c.l.b16 %v1383
    %v1423 = vunpack.c.l.b16 %v1384
    %v1424 = vunpack.c.l.b16 %v1385
    %v1425 = vunpack.c.l.b16 %v1386
    %v1426 = vunpack.c.l.b16 %v1387
    %v1427 = vunpack.c.l.b16 %v1388
    %v1428 = vunpack.c.l.b16 %v1389
    %v1429 = vpack.c.b16 %v1414, %v1413
    %v1430 = vpack.c.b16 %v1416, %v1415
    %v1431 = vpack.c.b16 %v1418, %v1417
    %v1432 = vpack.c.b16 %v1420, %v1419
    %v1433 = vpack.c.b16 %v1422, %v1421
    %v1434 = vpack.c.b16 %v1424, %v1423
    %v1435 = vpack.c.b16 %v1426, %v1425
    %v1436 = vpack.c.b16 %v1428, %v1427
    %1445 = vmatprep.subr.bf16.mxu0 0
    %1446 = vmatpush1.bf16.msra.mxu0 %v1429
    %1447 = vmatprep.subr.bf16.mxu0 0
    %1448 = vmatpush1.bf16.msra.mxu0 %v1430
    %1449 = vmatprep.subr.bf16.mxu0 0
    %1450 = vmatpush1.bf16.msra.mxu0 %v1431
    %1451 = vmatprep.subr.bf16.mxu0 0
    %1452 = vmatpush1.bf16.msra.mxu0 %v1432
    %1453 = vmatprep.subr.bf16.mxu0 0
    %1454 = vmatpush1.bf16.msra.mxu0 %v1433
    %1455 = vmatprep.subr.bf16.mxu0 0
    %1456 = vmatpush1.bf16.msra.mxu0 %v1434
    %1457 = vmatprep.subr.bf16.mxu0 0
    %1458 = vmatpush1.bf16.msra.mxu0 %v1435
    %1459 = vmatprep.subr.bf16.mxu0 0
    %1460 = vmatpush1.bf16.msra.mxu0 %v1436
    %1461 = vmatprep.subr.bf16.mxu0 0
    %1462 = vmatpush1.bf16.msra.mxu0 0
    %1463 = vmatprep.subr.bf16.mxu0 0
    %1464 = vmatpush1.bf16.msra.mxu0 0
    %1465 = vmatprep.subr.bf16.mxu0 0
    %1466 = vmatpush1.bf16.msra.mxu0 0
    %1467 = vmatprep.subr.bf16.mxu0 0
    %1468 = vmatpush1.bf16.msra.mxu0 0
    %1469 = vmatprep.subr.bf16.mxu0 0
    %1470 = vmatpush1.bf16.msra.mxu0 0
    %1471 = vmatprep.subr.bf16.mxu0 0
    %1472 = vmatpush1.bf16.msra.mxu0 0
    %1473 = vmatprep.subr.bf16.mxu0 0
    %1474 = vmatpush1.bf16.msra.mxu0 0
    %1475 = vmatprep.subr.bf16.mxu0 0
    %1476 = vmatpush1.bf16.msra.mxu0 0
    %1477 = vmatprep.mubr.bf16.mxu0 0
    %1478 = vmatmul.mubr.bf16.gmra.mrb[0].mxu0 %v1373
    %v1479 = vpop.f32.mrb[0].mxu0
    %v1480 = vadd.f32 %v1395, %v1479
    %v1481 = vpop.f32.mrb[0].mxu0
    %v1482 = vpop.f32.mrb[0].mxu0
    %v1483 = vpop.f32.mrb[0].mxu0
    %1484 = vdwg.mxu0
    %v1485 = vmax.f32 %v1480, 0.0
    %v1486 = vpack.c.bf16 %v1485, %v1485
    %v1487 = vld [vmem:[#allocation13] sm:$0xff]
    %v1488 = vld [vmem:[#allocation13 + $0x8] sm:$0xff]
    %v1489 = vld [vmem:[#allocation13 + $0x10] sm:$0xff]
    %v1490 = vld [vmem:[#allocation13 + $0x18] sm:$0xf]
    %v1491 = vld [vmem:[#allocation13 + $0x1c] sm:$0xff]
    %v1492 = vld [vmem:[#allocation13 + $0x24] sm:$0xff]
    %v1493 = vld [vmem:[#allocation13 + $0x2c] sm:$0xff]
    %v1494 = vld [vmem:[#allocation13 + $0x34] sm:$0xf]
    %v1495 = vld [vmem:[#allocation13 + $0x38] sm:$0xff]
    %v1496 = vld [vmem:[#allocation13 + $0x40] sm:$0xff]
    %v1497 = vld [vmem:[#allocation13 + $0x48] sm:$0xff]
    %v1498 = vld [vmem:[#allocation13 + $0x50] sm:$0xf]
    %v1499 = vld [vmem:[#allocation13 + $0x54] sm:$0xff]
    %v1500 = vld [vmem:[#allocation13 + $0x5c] sm:$0xff]
    %v1501 = vld [vmem:[#allocation13 + $0x64] sm:$0xff]
    %v1502 = vld [vmem:[#allocation13 + $0x6c] sm:$0xf]
    %v1503 = vld [vmem:[#allocation13 + $0x70] sm:$0xff]
    %v1504 = vld [vmem:[#allocation13 + $0x78] sm:$0xff]
    %v1505 = vld [vmem:[#allocation13 + $0x80] sm:$0xff]
    %v1506 = vld [vmem:[#allocation13 + $0x88] sm:$0xf]
    %v1507 = vld [vmem:[#allocation13 + $0x8c] sm:$0xff]
    %v1508 = vld [vmem:[#allocation13 + $0x94] sm:$0xff]
    %v1509 = vld [vmem:[#allocation13 + $0x9c] sm:$0xff]
    %v1510 = vld [vmem:[#allocation13 + $0xa4] sm:$0xf]
    %v1511 = vld [vmem:[#allocation13 + $0xa8] sm:$0xff]
    %v1512 = vld [vmem:[#allocation13 + $0xb0] sm:$0xff]
    %v1513 = vld [vmem:[#allocation13 + $0xb8] sm:$0xff]
    %v1514 = vld [vmem:[#allocation13 + $0xc0] sm:$0xf]
    %v1515 = vld [vmem:[#allocation13 + $0xc4] sm:$0xff]
    %v1516 = vld [vmem:[#allocation13 + $0xcc] sm:$0xff]
    %v1517 = vld [vmem:[#allocation13 + $0xd4] sm:$0xff]
    %v1518 = vld [vmem:[#allocation13 + $0xdc] sm:$0xf]
    %v1519 = vld [vmem:[#allocation13 + $0xe0] sm:$0xff]
    %v1520 = vld [vmem:[#allocation13 + $0xe8] sm:$0xff]
    %v1521 = vld [vmem:[#allocation13 + $0xf0] sm:$0xff]
    %v1522 = vld [vmem:[#allocation13 + $0xf8] sm:$0xf]
    %v1523 = vld [vmem:[#allocation13 + $0xfc] sm:$0xff]
    %v1524 = vld [vmem:[#allocation13 + $0x104] sm:$0xff]
    %v1525 = vld [vmem:[#allocation13 + $0x10c] sm:$0xff]
    %v1526 = vld [vmem:[#allocation13 + $0x114] sm:$0xf]
    %v1527 = vld [vmem:[#allocation13 + $0x118] sm:$0xff]
    %v1528 = vld [vmem:[#allocation13 + $0x120] sm:$0xff]
    %v1529 = vld [vmem:[#allocation13 + $0x128] sm:$0xff]
    %v1530 = vld [vmem:[#allocation13 + $0x130] sm:$0xf]
    %v1531 = vld [vmem:[#allocation13 + $0x134] sm:$0xff]
    %v1532 = vld [vmem:[#allocation13 + $0x13c] sm:$0xff]
    %v1533 = vld [vmem:[#allocation13 + $0x144] sm:$0xff]
    %v1534 = vld [vmem:[#allocation13 + $0x14c] sm:$0xf]
    %v1535 = vld [vmem:[#allocation13 + $0x150] sm:$0xff]
    %v1536 = vld [vmem:[#allocation13 + $0x158] sm:$0xff]
    %v1537 = vld [vmem:[#allocation13 + $0x160] sm:$0xff]
    %v1538 = vld [vmem:[#allocation13 + $0x168] sm:$0xf]
    %v1539 = vld [vmem:[#allocation13 + $0x16c] sm:$0xff]
    %v1540 = vld [vmem:[#allocation13 + $0x174] sm:$0xff]
    %v1541 = vld [vmem:[#allocation13 + $0x17c] sm:$0xff]
    %v1542 = vld [vmem:[#allocation13 + $0x184] sm:$0xf]
    %v1543 = vld [vmem:[#allocation13 + $0x188] sm:$0xff]
    %v1544 = vld [vmem:[#allocation13 + $0x190] sm:$0xff]
    %v1545 = vld [vmem:[#allocation13 + $0x198] sm:$0xff]
    %v1546 = vld [vmem:[#allocation13 + $0x1a0] sm:$0xf]
    %v1547 = vld [vmem:[#allocation13 + $0x1a4] sm:$0xff]
    %v1548 = vld [vmem:[#allocation13 + $0x1ac] sm:$0xff]
    %v1549 = vld [vmem:[#allocation13 + $0x1b4] sm:$0xff]
    %v1550 = vld [vmem:[#allocation13 + $0x1bc] sm:$0xf]
    %v1551 = vld [vmem:[%s16] sm:$0xff]
    %v1553 = vlaneseq
    %v1554 = vshrl.u32 %v1553, 7
    %v1555 = vsub.s32 0, %v1554
    %v1556 = vrot.slane %v1551, %v1555
    %v1557 = vlaneseq
    %v1558 = vshrl.u32 %v1557, 7
    %v1559 = vsub.s32 1, %v1558
    %v1560 = vrot.slane %v1551, %v1559
    %v1561 = vlaneseq
    %v1562 = vshrl.u32 %v1561, 7
    %v1563 = vsub.s32 2, %v1562
    %v1564 = vrot.slane %v1551, %v1563
    %v1565 = vlaneseq
    %v1566 = vshrl.u32 %v1565, 7
    %v1567 = vsub.s32 3, %v1566
    %v1568 = vrot.slane %v1551, %v1567
    %v1569 = vlaneseq
    %v1570 = vshrl.u32 %v1569, 7
    %v1571 = vsub.s32 4, %v1570
    %v1572 = vrot.slane %v1551, %v1571
    %v1573 = vlaneseq
    %v1574 = vshrl.u32 %v1573, 7
    %v1575 = vsub.s32 5, %v1574
    %v1576 = vrot.slane %v1551, %v1575
    %v1577 = vlaneseq
    %v1578 = vshrl.u32 %v1577, 7
    %v1579 = vsub.s32 6, %v1578
    %v1580 = vrot.slane %v1551, %v1579
    %v1652 = vunpack.c.l.b16 %v1487
    %v1653 = vunpack.c.h.b16 %v1487
    %v1654 = vunpack.c.l.b16 %v1488
    %v1655 = vunpack.c.h.b16 %v1488
    %v1656 = vunpack.c.l.b16 %v1489
    %v1657 = vunpack.c.h.b16 %v1489
    %v1658 = vunpack.c.l.b16 %v1490
    %v1659 = vunpack.c.l.b16 %v1491
    %v1660 = vunpack.c.h.b16 %v1491
    %v1661 = vunpack.c.l.b16 %v1492
    %v1662 = vunpack.c.h.b16 %v1492
    %v1663 = vunpack.c.l.b16 %v1493
    %v1664 = vunpack.c.h.b16 %v1493
    %v1665 = vunpack.c.l.b16 %v1494
    %v1666 = vunpack.c.l.b16 %v1495
    %v1667 = vunpack.c.h.b16 %v1495
    %v1668 = vunpack.c.l.b16 %v1496
    %v1669 = vunpack.c.h.b16 %v1496
    %v1670 = vunpack.c.l.b16 %v1497
    %v1671 = vunpack.c.h.b16 %v1497
    %v1672 = vunpack.c.l.b16 %v1498
    %v1673 = vunpack.c.l.b16 %v1499
    %v1674 = vunpack.c.h.b16 %v1499
    %v1675 = vunpack.c.l.b16 %v1500
    %v1676 = vunpack.c.h.b16 %v1500
    %v1677 = vunpack.c.l.b16 %v1501
    %v1678 = vunpack.c.h.b16 %v1501
    %v1679 = vunpack.c.l.b16 %v1502
    %v1680 = vunpack.c.l.b16 %v1503
    %v1681 = vunpack.c.h.b16 %v1503
    %v1682 = vunpack.c.l.b16 %v1504
    %v1683 = vunpack.c.h.b16 %v1504
    %v1684 = vunpack.c.l.b16 %v1505
    %v1685 = vunpack.c.h.b16 %v1505
    %v1686 = vunpack.c.l.b16 %v1506
    %v1687 = vunpack.c.l.b16 %v1507
    %v1688 = vunpack.c.h.b16 %v1507
    %v1689 = vunpack.c.l.b16 %v1508
    %v1690 = vunpack.c.h.b16 %v1508
    %v1691 = vunpack.c.l.b16 %v1509
    %v1692 = vunpack.c.h.b16 %v1509
    %v1693 = vunpack.c.l.b16 %v1510
    %v1694 = vunpack.c.l.b16 %v1511
    %v1695 = vunpack.c.h.b16 %v1511
    %v1696 = vunpack.c.l.b16 %v1512
    %v1697 = vunpack.c.h.b16 %v1512
    %v1698 = vunpack.c.l.b16 %v1513
    %v1699 = vunpack.c.h.b16 %v1513
    %v1700 = vunpack.c.l.b16 %v1514
    %v1701 = vunpack.c.l.b16 %v1515
    %v1702 = vunpack.c.h.b16 %v1515
    %v1703 = vunpack.c.l.b16 %v1516
    %v1704 = vunpack.c.h.b16 %v1516
    %v1705 = vunpack.c.l.b16 %v1517
    %v1706 = vunpack.c.h.b16 %v1517
    %v1707 = vunpack.c.l.b16 %v1518
    %v1708 = vunpack.c.l.b16 %v1519
    %v1709 = vunpack.c.h.b16 %v1519
    %v1710 = vunpack.c.l.b16 %v1520
    %v1711 = vunpack.c.h.b16 %v1520
    %v1712 = vunpack.c.l.b16 %v1521
    %v1713 = vunpack.c.h.b16 %v1521
    %v1714 = vunpack.c.l.b16 %v1522
    %v1715 = vunpack.c.l.b16 %v1523
    %v1716 = vunpack.c.h.b16 %v1523
    %v1717 = vunpack.c.l.b16 %v1524
    %v1718 = vunpack.c.h.b16 %v1524
    %v1719 = vunpack.c.l.b16 %v1525
    %v1720 = vunpack.c.h.b16 %v1525
    %v1721 = vunpack.c.l.b16 %v1526
    %v1722 = vunpack.c.l.b16 %v1527
    %v1723 = vunpack.c.h.b16 %v1527
    %v1724 = vunpack.c.l.b16 %v1528
    %v1725 = vunpack.c.h.b16 %v1528
    %v1726 = vunpack.c.l.b16 %v1529
    %v1727 = vunpack.c.h.b16 %v1529
    %v1728 = vunpack.c.l.b16 %v1530
    %v1729 = vunpack.c.l.b16 %v1531
    %v1730 = vunpack.c.h.b16 %v1531
    %v1731 = vunpack.c.l.b16 %v1532
    %v1732 = vunpack.c.h.b16 %v1532
    %v1733 = vunpack.c.l.b16 %v1533
    %v1734 = vunpack.c.h.b16 %v1533
    %v1735 = vunpack.c.l.b16 %v1534
    %v1736 = vunpack.c.l.b16 %v1535
    %v1737 = vunpack.c.h.b16 %v1535
    %v1738 = vunpack.c.l.b16 %v1536
    %v1739 = vunpack.c.h.b16 %v1536
    %v1740 = vunpack.c.l.b16 %v1537
    %v1741 = vunpack.c.h.b16 %v1537
    %v1742 = vunpack.c.l.b16 %v1538
    %v1743 = vunpack.c.l.b16 %v1539
    %v1744 = vunpack.c.h.b16 %v1539
    %v1745 = vunpack.c.l.b16 %v1540
    %v1746 = vunpack.c.h.b16 %v1540
    %v1747 = vunpack.c.l.b16 %v1541
    %v1748 = vunpack.c.h.b16 %v1541
    %v1749 = vunpack.c.l.b16 %v1542
    %v1750 = vunpack.c.l.b16 %v1543
    %v1751 = vunpack.c.h.b16 %v1543
    %v1752 = vunpack.c.l.b16 %v1544
    %v1753 = vunpack.c.h.b16 %v1544
    %v1754 = vunpack.c.l.b16 %v1545
    %v1755 = vunpack.c.h.b16 %v1545
    %v1756 = vunpack.c.l.b16 %v1546
    %v1757 = vunpack.c.l.b16 %v1547
    %v1758 = vunpack.c.h.b16 %v1547
    %v1759 = vunpack.c.l.b16 %v1548
    %v1760 = vunpack.c.h.b16 %v1548
    %v1761 = vunpack.c.l.b16 %v1549
    %v1762 = vunpack.c.h.b16 %v1549
    %v1763 = vunpack.c.l.b16 %v1550
    %v1764 = vpack.c.b16 %v1659, %v1652
    %v1765 = vpack.c.b16 %v1660, %v1653
    %v1766 = vpack.c.b16 %v1661, %v1654
    %v1767 = vpack.c.b16 %v1662, %v1655
    %v1768 = vpack.c.b16 %v1663, %v1656
    %v1769 = vpack.c.b16 %v1664, %v1657
    %v1770 = vpack.c.b16 %v1665, %v1658
    %v1771 = vpack.c.b16 %v1673, %v1666
    %v1772 = vpack.c.b16 %v1674, %v1667
    %v1773 = vpack.c.b16 %v1675, %v1668
    %v1774 = vpack.c.b16 %v1676, %v1669
    %v1775 = vpack.c.b16 %v1677, %v1670
    %v1776 = vpack.c.b16 %v1678, %v1671
    %v1777 = vpack.c.b16 %v1679, %v1672
    %v1778 = vpack.c.b16 %v1687, %v1680
    %v1779 = vpack.c.b16 %v1688, %v1681
    %v1780 = vpack.c.b16 %v1689, %v1682
    %v1781 = vpack.c.b16 %v1690, %v1683
    %v1782 = vpack.c.b16 %v1691, %v1684
    %v1783 = vpack.c.b16 %v1692, %v1685
    %v1784 = vpack.c.b16 %v1693, %v1686
    %v1785 = vpack.c.b16 %v1701, %v1694
    %v1786 = vpack.c.b16 %v1702, %v1695
    %v1787 = vpack.c.b16 %v1703, %v1696
    %v1788 = vpack.c.b16 %v1704, %v1697
    %v1789 = vpack.c.b16 %v1705, %v1698
    %v1790 = vpack.c.b16 %v1706, %v1699
    %v1791 = vpack.c.b16 %v1707, %v1700
    %v1792 = vpack.c.b16 %v1715, %v1708
    %v1793 = vpack.c.b16 %v1716, %v1709
    %v1794 = vpack.c.b16 %v1717, %v1710
    %v1795 = vpack.c.b16 %v1718, %v1711
    %v1796 = vpack.c.b16 %v1719, %v1712
    %v1797 = vpack.c.b16 %v1720, %v1713
    %v1798 = vpack.c.b16 %v1721, %v1714
    %v1799 = vpack.c.b16 %v1729, %v1722
    %v1800 = vpack.c.b16 %v1730, %v1723
    %v1801 = vpack.c.b16 %v1731, %v1724
    %v1802 = vpack.c.b16 %v1732, %v1725
    %v1803 = vpack.c.b16 %v1733, %v1726
    %v1804 = vpack.c.b16 %v1734, %v1727
    %v1805 = vpack.c.b16 %v1735, %v1728
    %v1806 = vpack.c.b16 %v1743, %v1736
    %v1807 = vpack.c.b16 %v1744, %v1737
    %v1808 = vpack.c.b16 %v1745, %v1738
    %v1809 = vpack.c.b16 %v1746, %v1739
    %v1810 = vpack.c.b16 %v1747, %v1740
    %v1811 = vpack.c.b16 %v1748, %v1741
    %v1812 = vpack.c.b16 %v1749, %v1742
    %v1813 = vpack.c.b16 %v1757, %v1750
    %v1814 = vpack.c.b16 %v1758, %v1751
    %v1815 = vpack.c.b16 %v1759, %v1752
    %v1816 = vpack.c.b16 %v1760, %v1753
    %v1817 = vpack.c.b16 %v1761, %v1754
    %v1818 = vpack.c.b16 %v1762, %v1755
    %v1819 = vpack.c.b16 %v1763, %v1756
    %1876 = vmatprep.subr.bf16.mxu0 %v1765
    %1877 = vmatpush1.bf16.msra.mxu0 %v1764
    %1878 = vmatprep.subr.bf16.mxu0 %v1772
    %1879 = vmatpush1.bf16.msra.mxu0 %v1771
    %1880 = vmatprep.subr.bf16.mxu0 %v1779
    %1881 = vmatpush1.bf16.msra.mxu0 %v1778
    %1882 = vmatprep.subr.bf16.mxu0 %v1786
    %1883 = vmatpush1.bf16.msra.mxu0 %v1785
    %1884 = vmatprep.subr.bf16.mxu0 %v1793
    %1885 = vmatpush1.bf16.msra.mxu0 %v1792
    %1886 = vmatprep.subr.bf16.mxu0 %v1800
    %1887 = vmatpush1.bf16.msra.mxu0 %v1799
    %1888 = vmatprep.subr.bf16.mxu0 %v1807
    %1889 = vmatpush1.bf16.msra.mxu0 %v1806
    %1890 = vmatprep.subr.bf16.mxu0 %v1814
    %1891 = vmatpush1.bf16.msra.mxu0 %v1813
    %1892 = vmatprep.subr.bf16.mxu0 0
    %1893 = vmatpush1.bf16.msra.mxu0 0
    %1894 = vmatprep.subr.bf16.mxu0 0
    %1895 = vmatpush1.bf16.msra.mxu0 0
    %1896 = vmatprep.subr.bf16.mxu0 0
    %1897 = vmatpush1.bf16.msra.mxu0 0
    %1898 = vmatprep.subr.bf16.mxu0 0
    %1899 = vmatpush1.bf16.msra.mxu0 0
    %1900 = vmatprep.subr.bf16.mxu0 0
    %1901 = vmatpush1.bf16.msra.mxu0 0
    %1902 = vmatprep.subr.bf16.mxu0 0
    %1903 = vmatpush1.bf16.msra.mxu0 0
    %1904 = vmatprep.subr.bf16.mxu0 0
    %1905 = vmatpush1.bf16.msra.mxu0 0
    %1906 = vmatprep.subr.bf16.mxu0 0
    %1907 = vmatpush1.bf16.msra.mxu0 0
    %1908 = vmatprep.mubr.bf16.mxu0 0
    %1909 = vmatmul.mubr.bf16.gmra.mrb[0].mxu0 %v1486
    %v1910 = vpop.f32.mrb[0].mxu0
    %v1911 = vadd.f32 %v1556, %v1910
    %v1912 = vpop.f32.mrb[0].mxu0
    %v1913 = vadd.f32 %v1560, %v1912
    %v1914 = vpop.f32.mrb[0].mxu0
    %v1915 = vpop.f32.mrb[0].mxu0
    %1916 = vdwg.mxu0
    %1917 = vmatprep.subr.bf16.mxu0 %v1767
    %1918 = vmatpush1.bf16.msra.mxu0 %v1766
    %1919 = vmatprep.subr.bf16.mxu0 %v1774
    %1920 = vmatpush1.bf16.msra.mxu0 %v1773
    %1921 = vmatprep.subr.bf16.mxu0 %v1781
    %1922 = vmatpush1.bf16.msra.mxu0 %v1780
    %1923 = vmatprep.subr.bf16.mxu0 %v1788
    %1924 = vmatpush1.bf16.msra.mxu0 %v1787
    %1925 = vmatprep.subr.bf16.mxu0 %v1795
    %1926 = vmatpush1.bf16.msra.mxu0 %v1794
    %1927 = vmatprep.subr.bf16.mxu0 %v1802
    %1928 = vmatpush1.bf16.msra.mxu0 %v1801
    %1929 = vmatprep.subr.bf16.mxu0 %v1809
    %1930 = vmatpush1.bf16.msra.mxu0 %v1808
    %1931 = vmatprep.subr.bf16.mxu0 %v1816
    %1932 = vmatpush1.bf16.msra.mxu0 %v1815
    %1933 = vmatprep.subr.bf16.mxu0 0
    %1934 = vmatpush1.bf16.msra.mxu0 0
    %1935 = vmatprep.subr.bf16.mxu0 0
    %1936 = vmatpush1.bf16.msra.mxu0 0
    %1937 = vmatprep.subr.bf16.mxu0 0
    %1938 = vmatpush1.bf16.msra.mxu0 0
    %1939 = vmatprep.subr.bf16.mxu0 0
    %1940 = vmatpush1.bf16.msra.mxu0 0
    %1941 = vmatprep.subr.bf16.mxu0 0
    %1942 = vmatpush1.bf16.msra.mxu0 0
    %1943 = vmatprep.subr.bf16.mxu0 0
    %1944 = vmatpush1.bf16.msra.mxu0 0
    %1945 = vmatprep.subr.bf16.mxu0 0
    %1946 = vmatpush1.bf16.msra.mxu0 0
    %1947 = vmatprep.subr.bf16.mxu0 0
    %1948 = vmatpush1.bf16.msra.mxu0 0
    %1949 = vmatprep.mubr.bf16.mxu0 0
    %1950 = vmatmul.mubr.bf16.gmra.mrb[0].mxu0 %v1486
    %v1951 = vpop.f32.mrb[0].mxu0
    %v1952 = vadd.f32 %v1564, %v1951
    %v1953 = vpop.f32.mrb[0].mxu0
    %v1954 = vadd.f32 %v1568, %v1953
    %v1955 = vpop.f32.mrb[0].mxu0
    %v1956 = vpop.f32.mrb[0].mxu0
    %1957 = vdwg.mxu0
    %1958 = vmatprep.subr.bf16.mxu0 %v1769
    %1959 = vmatpush1.bf16.msra.mxu0 %v1768
    %1960 = vmatprep.subr.bf16.mxu0 %v1776
    %1961 = vmatpush1.bf16.msra.mxu0 %v1775
    %1962 = vmatprep.subr.bf16.mxu0 %v1783
    %1963 = vmatpush1.bf16.msra.mxu0 %v1782
    %1964 = vmatprep.subr.bf16.mxu0 %v1790
    %1965 = vmatpush1.bf16.msra.mxu0 %v1789
    %1966 = vmatprep.subr.bf16.mxu0 %v1797
    %1967 = vmatpush1.bf16.msra.mxu0 %v1796
    %1968 = vmatprep.subr.bf16.mxu0 %v1804
    %1969 = vmatpush1.bf16.msra.mxu0 %v1803
    %1970 = vmatprep.subr.bf16.mxu0 %v1811
    %1971 = vmatpush1.bf16.msra.mxu0 %v1810
    %1972 = vmatprep.subr.bf16.mxu0 %v1818
    %1973 = vmatpush1.bf16.msra.mxu0 %v1817
    %1974 = vmatprep.subr.bf16.mxu0 0
    %1975 = vmatpush1.bf16.msra.mxu0 0
    %1976 = vmatprep.subr.bf16.mxu0 0
    %1977 = vmatpush1.bf16.msra.mxu0 0
    %1978 = vmatprep.subr.bf16.mxu0 0
    %1979 = vmatpush1.bf16.msra.mxu0 0
    %1980 = vmatprep.subr.bf16.mxu0 0
    %1981 = vmatpush1.bf16.msra.mxu0 0
    %1982 = vmatprep.subr.bf16.mxu0 0
    %1983 = vmatpush1.bf16.msra.mxu0 0
    %1984 = vmatprep.subr.bf16.mxu0 0
    %1985 = vmatpush1.bf16.msra.mxu0 0
    %1986 = vmatprep.subr.bf16.mxu0 0
    %1987 = vmatpush1.bf16.msra.mxu0 0
    %1988 = vmatprep.subr.bf16.mxu0 0
    %1989 = vmatpush1.bf16.msra.mxu0 0
    %1990 = vmatprep.mubr.bf16.mxu0 0
    %1991 = vmatmul.mubr.bf16.gmra.mrb[0].mxu0 %v1486
    %v1992 = vpop.f32.mrb[0].mxu0
    %v1993 = vadd.f32 %v1572, %v1992
    %v1994 = vpop.f32.mrb[0].mxu0
    %v1995 = vadd.f32 %v1576, %v1994
    %v1996 = vpop.f32.mrb[0].mxu0
    %v1997 = vpop.f32.mrb[0].mxu0
    %1998 = vdwg.mxu0
    %1999 = vmatprep.subr.bf16.mxu0 0
    %2000 = vmatpush1.bf16.msra.mxu0 %v1770
    %2001 = vmatprep.subr.bf16.mxu0 0
    %2002 = vmatpush1.bf16.msra.mxu0 %v1777
    %2003 = vmatprep.subr.bf16.mxu0 0
    %2004 = vmatpush1.bf16.msra.mxu0 %v1784
    %2005 = vmatprep.subr.bf16.mxu0 0
    %2006 = vmatpush1.bf16.msra.mxu0 %v1791
    %2007 = vmatprep.subr.bf16.mxu0 0
    %2008 = vmatpush1.bf16.msra.mxu0 %v1798
    %2009 = vmatprep.subr.bf16.mxu0 0
    %2010 = vmatpush1.bf16.msra.mxu0 %v1805
    %2011 = vmatprep.subr.bf16.mxu0 0
    %2012 = vmatpush1.bf16.msra.mxu0 %v1812
    %2013 = vmatprep.subr.bf16.mxu0 0
    %2014 = vmatpush1.bf16.msra.mxu0 %v1819
    %2015 = vmatprep.subr.bf16.mxu0 0
    %2016 = vmatpush1.bf16.msra.mxu0 0
    %2017 = vmatprep.subr.bf16.mxu0 0
    %2018 = vmatpush1.bf16.msra.mxu0 0
    %2019 = vmatprep.subr.bf16.mxu0 0
    %2020 = vmatpush1.bf16.msra.mxu0 0
    %2021 = vmatprep.subr.bf16.mxu0 0
    %2022 = vmatpush1.bf16.msra.mxu0 0
    %2023 = vmatprep.subr.bf16.mxu0 0
    %2024 = vmatpush1.bf16.msra.mxu0 0
    %2025 = vmatprep.subr.bf16.mxu0 0
    %2026 = vmatpush1.bf16.msra.mxu0 0
    %2027 = vmatprep.subr.bf16.mxu0 0
    %2028 = vmatpush1.bf16.msra.mxu0 0
    %2029 = vmatprep.subr.bf16.mxu0 0
    %2030 = vmatpush1.bf16.msra.mxu0 0
    %2031 = vmatprep.mubr.bf16.mxu0 0
    %2032 = vmatmul.mubr.bf16.gmra.mrb[0].mxu0 %v1486
    %v2033 = vpop.f32.mrb[0].mxu0
    %v2034 = vadd.f32 %v1580, %v2033
    %v2035 = vpop.f32.mrb[0].mxu0
    %v2036 = vpop.f32.mrb[0].mxu0
    %v2037 = vpop.f32.mrb[0].mxu0
    %2038 = vdwg.mxu0
    %v2039 = vtanh.pop %v1911
    %v2040 = vtanh.pop %v1913
    %v2041 = vtanh.pop %v1952
    %v2042 = vtanh.pop %v1954
    %v2043 = vtanh.pop %v1993
    %v2044 = vtanh.pop %v1995
    %v2045 = vtanh.pop %v2034
    %2046 = vst [vmem:[%s17] sm:$0xff] %v2039
    %2047 = vst [vmem:[%s17 + $0x8] sm:$0xff] %v2040
    %2048 = vst [vmem:[%s17 + $0x10] sm:$0xff] %v2041
    %2049 = vst [vmem:[%s17 + $0x18] sm:$0xff] %v2042
    %2050 = vst [vmem:[%s17 + $0x20] sm:$0xff] %v2043
    %2051 = vst [vmem:[%s17 + $0x28] sm:$0xff] %v2044
    %2052 = vst [vmem:[%s17 + $0x30] sm:$0xff] %v2045
    // Predicated region
    $region102: #{autoencoder_forward.1} parent=1 // pred_check
      _
    $region103: #{autoencoder_forward.1} parent=1 // pred_check_branch
      %2054 = sbr.rel (0) target = $region105
    $region104: #{autoencoder_forward.1} parent=1 // pred_region
      _
    $region105: #{autoencoder_forward.1} parent=1 // pred_fallthru
      _
    // Predicated region
    $region106: #{autoencoder_forward.1} parent=1 // pred_check
      _
    $region107: #{autoencoder_forward.1} parent=1 // pred_check_branch
      %2056 = sbr.rel (0) target = $region109
    $region108: #{autoencoder_forward.1} parent=1 // pred_region
      _
    $region109: #{autoencoder_forward.1} parent=1 // pred_fallthru
      _
    %2057 = vsyncpa [#allocation3], 1
    %2058 = vsyncpa [#allocation5], 1
    %2059 = vsyncpa [#allocation8], 1
    %2060 = vsyncpa [#allocation11], 1
    %2061 = vsyncpa [#allocation14], 1

</llo_original>
